<compile_context>
chip_gen: v7x
topology: tpu7x:2x2x1
jax: 0.10.0
libtpu: 0.0.40
codegen_flags: <defaults>
</compile_context>

<pallas_src>
import math

import jax
import jax.numpy as jnp
import numpy as np
from jax.experimental import pallas as pl
from jax.experimental.pallas import tpu as pltpu

# Default-config branch of the module calls flash-attn's layer_norm_fn, whose
# default eps is 1e-6.
# TODO(synk): the normalize-only branch (F.layer_norm) would use eps=1e-5.
EPS = 1e-6


def _round_up(x, m):
    return ((x + m - 1) // m) * m


def rebased_feature_map_kernel(x_ref, gamma_ref, beta_ref, sa_ref, sb_ref, o_ref):
    # x_ref: (TM, D)   gamma/beta: (1, D)   sa/sb: (D, D_out)   o_ref: (TM, D_out)
    x = x_ref[...].astype(jnp.float32)

    # ---- LayerNorm over head_dim (biased variance, like torch) ----
    mean = jnp.mean(x, axis=-1, keepdims=True)
    xc = x - mean
    var = jnp.mean(xc * xc, axis=-1, keepdims=True)
    xn = xc * jax.lax.rsqrt(var + EPS)
    xn = xn * gamma_ref[...].astype(jnp.float32) + beta_ref[...].astype(jnp.float32)

    # ---- quadratic (rebased) feature map via selection-matrix matmuls ----
    # MXU is idle in this store-bound kernel, so the two tiny (TM,D)x(D,D_out)
    # matmuls are free; HIGHEST keeps f32 accuracy of the selected factors.
    a = jnp.dot(xn, sa_ref[...],
                preferred_element_type=jnp.float32,
                precision=jax.lax.Precision.HIGHEST)
    b = jnp.dot(xn, sb_ref[...],
                preferred_element_type=jnp.float32,
                precision=jax.lax.Precision.HIGHEST)
    o_ref[...] = (a * b).astype(o_ref.dtype)


def _selection_matrices(d):
    """S_a, S_b with one non-zero per column.  Output-feature order matches the
    PyTorch module: first D diagonal terms scaled by d**-0.5, then the strict
    upper triangle in row-major (torch.triu_indices(d, d, 1)) order scaled by
    sqrt(2/d)."""
    d_out = d + d * (d - 1) // 2
    sa = np.zeros((d, d_out), dtype=np.float32)
    sb = np.zeros((d, d_out), dtype=np.float32)
    diag_scale = d ** (-0.5)
    off_scale = (2.0 / d) ** 0.5
    col = 0
    for k in range(d):                       # x_k * x_k
        sa[k, col] = diag_scale
        sb[k, col] = 1.0
        col += 1
    for i in range(d):                       # x_i * x_j, j > i, row-major
        for j in range(i + 1, d):
            sa[i, col] = off_scale
            sb[j, col] = 1.0
            col += 1
    return jnp.asarray(sa), jnp.asarray(sb)


def rebased_feature_map(x, gamma, beta, *, tm=1024):
    """LayerNorm(gamma, beta) along the last dim, then the rebased quadratic
    feature map with flatten=True (diag features followed by strict-upper
    outer-product features)."""
    *lead, d = x.shape
    n = math.prod(lead) if lead else 1
    d_out = d + d * (d - 1) // 2

    # Effective row tile: large, multiple of 8, never larger than the
    # 8-rounded row count.  Remainder rows are zero-padded, then sliced off.
    tm_eff = min(tm, _round_up(max(n, 1), 8))
    n_pad = _round_up(max(n, 1), tm_eff)

    x2 = x.reshape(n, d)
    if n_pad != n:
        x2 = jnp.pad(x2, ((0, n_pad - n), (0, 0)))
    g2 = gamma.reshape(1, d)
    b2 = beta.reshape(1, d)
    sa, sb = _selection_matrices(d)

    out = pl.pallas_call(
        rebased_feature_map_kernel,
        out_shape=jax.ShapeDtypeStruct((n_pad, d_out), x.dtype),
        grid_spec=pl.GridSpec(
            grid=(n_pad // tm_eff,),
            in_specs=[
                pl.BlockSpec((tm_eff, d), lambda i: (i, 0)),
                pl.BlockSpec((1, d), lambda i: (0, 0)),
                pl.BlockSpec((1, d), lambda i: (0, 0)),
                pl.BlockSpec((d, d_out), lambda i: (0, 0)),
                pl.BlockSpec((d, d_out), lambda i: (0, 0)),
            ],
            out_specs=pl.BlockSpec((tm_eff, d_out), lambda i: (i, 0)),
        ),
        compiler_params=pltpu.CompilerParams(
            dimension_semantics=("parallel",),
        ),
    )(x2, g2, b2, sa, sb)

    if n_pad != n:
        out = out[:n]
    return out.reshape(*lead, d_out)


def _reference(x, gamma, beta):
    """Pure-JAX reference mirroring the PyTorch forward (flatten=True)."""
    d = x.shape[-1]
    mean = jnp.mean(x, axis=-1, keepdims=True)
    xc = x - mean
    var = jnp.mean(xc * xc, axis=-1, keepdims=True)
    xn = xc * jax.lax.rsqrt(var + EPS) * gamma + beta
    z = jnp.einsum("...i,...j->...ij", xn, xn)
    iu, ju = jnp.triu_indices(d, k=1)
    off = z[..., iu, ju]
    diag = z[..., jnp.arange(d), jnp.arange(d)]
    return jnp.concatenate(
        [diag * d ** (-0.5), off * (2.0 / d) ** 0.5], axis=-1
    )


if __name__ == "__main__":
    key = jax.random.PRNGKey(0)
    B, H, L, D = 2, 4, 16, 16  # head_dim = 16
    d_out = D + D * (D - 1) // 2

    x = jax.random.normal(key, (B, H, L, D), dtype=jnp.float32)
    # Deterministic parameter init per nn.Module __init__:
    gamma = jnp.ones((D,), dtype=jnp.float32)   # nn.Parameter(torch.ones(head_dim))
    beta = jnp.zeros((D,), dtype=jnp.float32)   # nn.Parameter(torch.zeros(head_dim))

    out = jax.block_until_ready(rebased_feature_map(x, gamma, beta))
    ref = _reference(x, gamma, beta)
    assert out.shape == (B, H, L, d_out)
    assert jnp.allclose(out, ref, atol=1e-4, rtol=1e-4), float(
        jnp.max(jnp.abs(out - ref))
    )

    # Exercise the remainder/padding path (row count not a multiple of the tile).
    x2_in = jax.random.normal(jax.random.PRNGKey(1), (3, 2, 25, D), dtype=jnp.float32)
    out2 = jax.block_until_ready(rebased_feature_map(x2_in, gamma, beta, tm=64))
    ref2 = _reference(x2_in, gamma, beta)
    assert out2.shape == (3, 2, 25, d_out)
    assert jnp.allclose(out2, ref2, atol=1e-4, rtol=1e-4), float(
        jnp.max(jnp.abs(out2 - ref2))
    )

    print("KERNEL_OK")
</pallas_src>

<mosaic_0001>
module attributes {stable_mosaic.version = 11 : i64} {
  func.func @rebased_feature_map_kernel(%arg0: i32, %arg1: memref<128x16xf32, #tpu.memory_space<vmem>>, %arg2: memref<1x16xf32, #tpu.memory_space<vmem>>, %arg3: memref<1x16xf32, #tpu.memory_space<vmem>>, %arg4: memref<16x136xf32, #tpu.memory_space<vmem>>, %arg5: memref<16x136xf32, #tpu.memory_space<vmem>>, %arg6: memref<128x136xf32, #tpu.memory_space<vmem>>) attributes {dimension_semantics = [#tpu.dimension_semantics<parallel>], iteration_bounds = array<i64: 1>, scalar_prefetch = 0 : i64, scratch_operands = 0 : i64, tpu.core_type = #tpu.core_type<tc>, window_params = [{transform_indices = @transform_0, window_bounds = array<i64: 128, 16>}, {pipeline_mode = #tpu.pipeline_mode<synchronous>, transform_indices = @transform_1, window_bounds = array<i64: 1, 16>}, {pipeline_mode = #tpu.pipeline_mode<synchronous>, transform_indices = @transform_2, window_bounds = array<i64: 1, 16>}, {pipeline_mode = #tpu.pipeline_mode<synchronous>, transform_indices = @transform_3, window_bounds = array<i64: 16, 136>}, {pipeline_mode = #tpu.pipeline_mode<synchronous>, transform_indices = @transform_4, window_bounds = array<i64: 16, 136>}, {transform_indices = @transform_5, window_bounds = array<i64: 128, 136>}]} {
    %c0 = arith.constant 0 : index
    %c0_0 = arith.constant 0 : index
    %0 = vector.load %arg1[%c0, %c0_0] : memref<128x16xf32, #tpu.memory_space<vmem>>, vector<128x16xf32>
    %cst = arith.constant dense<0.000000e+00> : vector<128xf32>
    %1 = vector.multi_reduction <add>, %0, %cst [1] : vector<128x16xf32> to vector<128xf32>
    %2 = vector.shape_cast %1 : vector<128xf32> to vector<128x1xf32>
    %cst_1 = arith.constant 1.600000e+01 : f32
    %3 = vector.broadcast %cst_1 : f32 to vector<128x1xf32>
    %4 = arith.divf %2, %3 : vector<128x1xf32>
    %5 = vector.broadcast %4 : vector<128x1xf32> to vector<128x16xf32>
    %6 = arith.subf %0, %5 : vector<128x16xf32>
    %7 = arith.mulf %6, %6 : vector<128x16xf32>
    %cst_2 = arith.constant dense<0.000000e+00> : vector<128xf32>
    %8 = vector.multi_reduction <add>, %7, %cst_2 [1] : vector<128x16xf32> to vector<128xf32>
    %9 = vector.shape_cast %8 : vector<128xf32> to vector<128x1xf32>
    %cst_3 = arith.constant 1.600000e+01 : f32
    %10 = vector.broadcast %cst_3 : f32 to vector<128x1xf32>
    %11 = arith.divf %9, %10 : vector<128x1xf32>
    %cst_4 = arith.constant 9.99999997E-7 : f32
    %12 = vector.broadcast %cst_4 : f32 to vector<128x1xf32>
    %13 = arith.addf %11, %12 : vector<128x1xf32>
    %14 = math.rsqrt %13 : vector<128x1xf32>
    %15 = vector.broadcast %14 : vector<128x1xf32> to vector<128x16xf32>
    %16 = arith.mulf %6, %15 : vector<128x16xf32>
    %c0_5 = arith.constant 0 : index
    %c0_6 = arith.constant 0 : index
    %17 = vector.load %arg2[%c0_5, %c0_6] : memref<1x16xf32, #tpu.memory_space<vmem>>, vector<1x16xf32>
    %18 = vector.broadcast %17 : vector<1x16xf32> to vector<128x16xf32>
    %19 = arith.mulf %16, %18 : vector<128x16xf32>
    %c0_7 = arith.constant 0 : index
    %c0_8 = arith.constant 0 : index
    %20 = vector.load %arg3[%c0_7, %c0_8] : memref<1x16xf32, #tpu.memory_space<vmem>>, vector<1x16xf32>
    %21 = vector.broadcast %20 : vector<1x16xf32> to vector<128x16xf32>
    %22 = arith.addf %19, %21 : vector<128x16xf32>
    %c0_9 = arith.constant 0 : index
    %c0_10 = arith.constant 0 : index
    %23 = vector.load %arg4[%c0_9, %c0_10] : memref<16x136xf32, #tpu.memory_space<vmem>>, vector<16x136xf32>
    %cst_11 = arith.constant dense<0.000000e+00> : vector<128x136xf32>
    %24 = tpu.matmul %22, %23, %cst_11 {dimension_numbers = #tpu.dot_dimension_numbers<[1], [0], [0], [1], [0, 0, 1, 1], [], []>, precision = #tpu.contract_precision<fp32>} : vector<128x16xf32>, vector<16x136xf32>, vector<128x136xf32> -> vector<128x136xf32>
    %c0_12 = arith.constant 0 : index
    %c0_13 = arith.constant 0 : index
    %25 = vector.load %arg5[%c0_12, %c0_13] : memref<16x136xf32, #tpu.memory_space<vmem>>, vector<16x136xf32>
    %cst_14 = arith.constant dense<0.000000e+00> : vector<128x136xf32>
    %26 = tpu.matmul %22, %25, %cst_14 {dimension_numbers = #tpu.dot_dimension_numbers<[1], [0], [0], [1], [0, 0, 1, 1], [], []>, precision = #tpu.contract_precision<fp32>} : vector<128x16xf32>, vector<16x136xf32>, vector<128x136xf32> -> vector<128x136xf32>
    %27 = arith.mulf %24, %26 : vector<128x136xf32>
    %c0_15 = arith.constant 0 : index
    %c0_16 = arith.constant 0 : index
    %28 = vector.load %arg6[%c0_15, %c0_16] : memref<128x136xf32, #tpu.memory_space<vmem>>, vector<128x136xf32>
    tpu.vector_store %arg6[%c0_15, %c0_16], %27 {strides = array<i32>} : memref<128x136xf32, #tpu.memory_space<vmem>>, vector<128x136xf32>,
    return
  }
  func.func @transform_0(%arg0: i32) -> (i32, i32) {
    %c0_i32 = arith.constant 0 : i32
    %c0_i32_0 = arith.constant 0 : i32
    return %arg0, %c0_i32 : i32, i32
  }
  func.func @transform_1(%arg0: i32) -> (i32, i32) {
    %c0_i32 = arith.constant 0 : i32
    %c0_i32_0 = arith.constant 0 : i32
    %c0_i32_1 = arith.constant 0 : i32
    return %c0_i32, %c0_i32_0 : i32, i32
  }
  func.func @transform_2(%arg0: i32) -> (i32, i32) {
    %c0_i32 = arith.constant 0 : i32
    %c0_i32_0 = arith.constant 0 : i32
    %c0_i32_1 = arith.constant 0 : i32
    return %c0_i32, %c0_i32_0 : i32, i32
  }
  func.func @transform_3(%arg0: i32) -> (i32, i32) {
    %c0_i32 = arith.constant 0 : i32
    %c0_i32_0 = arith.constant 0 : i32
    %c0_i32_1 = arith.constant 0 : i32
    return %c0_i32, %c0_i32_0 : i32, i32
  }
  func.func @transform_4(%arg0: i32) -> (i32, i32) {
    %c0_i32 = arith.constant 0 : i32
    %c0_i32_0 = arith.constant 0 : i32
    %c0_i32_1 = arith.constant 0 : i32
    return %c0_i32, %c0_i32_0 : i32, i32
  }
  func.func @transform_5(%arg0: i32) -> (i32, i32) {
    %c0_i32 = arith.constant 0 : i32
    %c0_i32_0 = arith.constant 0 : i32
    return %arg0, %c0_i32 : i32, i32
  }
}

</mosaic_0001>

<llo_original>
// kernel: tpu_custom_call.1
$region0: #{tpu_custom_call.1}
  #allocation0 [shape = 'u32[]', space=smem, size = 0x4, offset = 0x4, fixed_abs, tag = 'smem constant byte address 0x4 - core index']
  #allocation1 [shape = 'u32[144,128]{1,0:T(1,128)}', space=vmem, size = 0x12000, scoped, tag = 'internal scratch']
  %s0 = inlined_call_operand.vmem [shape: f32[128,16], index: 0, kind: input, shape index: {}]
  %s1 = inlined_call_operand.vmem [shape: f32[1,16], index: 1, kind: input, shape index: {}]
  %s2 = inlined_call_operand.vmem [shape: f32[1,16], index: 2, kind: input, shape index: {}]
  %s3 = inlined_call_operand.vmem [shape: f32[16,136], index: 3, kind: input, shape index: {}]
  %s4 = inlined_call_operand.vmem [shape: f32[16,136], index: 4, kind: input, shape index: {}]
  %s5 = inlined_call_operand.vmem [shape: f32[128,136], index: 5, kind: output, shape index: {}]
  %s6 = sld [smem:[#allocation0]]
  $region30: #{tpu_custom_call.1} parent=0
    _
  %s8 = ssub.s32 1, %s6
  %s9 = scalar_select 0, %s8, %s6
  // Predicated region
  $region2: #{tpu_custom_call.1} parent=0 // pred_check
    _
  $region3: #{tpu_custom_call.1} parent=0 // pred_check_branch
    %11 = sbr.rel (0) target = $region5
  $region4: #{tpu_custom_call.1} parent=0 // pred_region
    _
  $region5: #{tpu_custom_call.1} parent=0 // pred_fallthru
    _
  // Predicated region
  $region6: #{tpu_custom_call.1} parent=0 // pred_check
    _
  $region7: #{tpu_custom_call.1} parent=0 // pred_check_branch
    %13 = sbr.rel (0) target = $region9
  $region8: #{tpu_custom_call.1} parent=0 // pred_region
    _
  $region9: #{tpu_custom_call.1} parent=0 // pred_fallthru
    _
  // Predicated region
  $region10: #{tpu_custom_call.1} parent=0 // pred_check
    _
  $region11: #{tpu_custom_call.1} parent=0 // pred_check_branch
    %15 = sbr.rel (0) target = $region13
  $region12: #{tpu_custom_call.1} parent=0 // pred_region
    _
  $region13: #{tpu_custom_call.1} parent=0 // pred_fallthru
    _
  // Predicated region
  $region14: #{tpu_custom_call.1} parent=0 // pred_check
    _
  $region15: #{tpu_custom_call.1} parent=0 // pred_check_branch
    %17 = sbr.rel (0) target = $region17
  $region16: #{tpu_custom_call.1} parent=0 // pred_region
    _
  $region17: #{tpu_custom_call.1} parent=0 // pred_fallthru
    _
  // Predicated region
  $region18: #{tpu_custom_call.1} parent=0 // pred_check
    _
  $region19: #{tpu_custom_call.1} parent=0 // pred_check_branch
    %19 = sbr.rel (0) target = $region21
  $region20: #{tpu_custom_call.1} parent=0 // pred_region
    _
  $region21: #{tpu_custom_call.1} parent=0 // pred_fallthru
    _
  %v20 = vld [vmem:[%s0] sm:$0xff]
  %v21 = vld [vmem:[%s0 + $0x8] sm:$0xff]
  %v22 = vld [vmem:[%s0 + $0x10] sm:$0xff]
  %v23 = vld [vmem:[%s0 + $0x18] sm:$0xff]
  %v24 = vld [vmem:[%s0 + $0x20] sm:$0xff]
  %v25 = vld [vmem:[%s0 + $0x28] sm:$0xff]
  %v26 = vld [vmem:[%s0 + $0x30] sm:$0xff]
  %v27 = vld [vmem:[%s0 + $0x38] sm:$0xff]
  %v28 = vld [vmem:[%s0 + $0x40] sm:$0xff]
  %v29 = vld [vmem:[%s0 + $0x48] sm:$0xff]
  %v30 = vld [vmem:[%s0 + $0x50] sm:$0xff]
  %v31 = vld [vmem:[%s0 + $0x58] sm:$0xff]
  %v32 = vld [vmem:[%s0 + $0x60] sm:$0xff]
  %v33 = vld [vmem:[%s0 + $0x68] sm:$0xff]
  %v34 = vld [vmem:[%s0 + $0x70] sm:$0xff]
  %v35 = vld [vmem:[%s0 + $0x78] sm:$0xff]
  %vm36 = vcmask 130048
  %v37 = vsel %vm36, %v20, 0.0
  %38 = vadd.xlane.f32.xlu0 %v37
  %v39 = vpop.xlane.xlu0 %38
  %v40 = vsel %vm36, %v21, 0.0
  %41 = vadd.xlane.f32.xlu0 %v40
  %v42 = vpop.xlane.xlu0 %41
  %v43 = vsel %vm36, %v22, 0.0
  %44 = vadd.xlane.f32.xlu0 %v43
  %v45 = vpop.xlane.xlu0 %44
  %v46 = vsel %vm36, %v23, 0.0
  %47 = vadd.xlane.f32.xlu0 %v46
  %v48 = vpop.xlane.xlu0 %47
  %v49 = vsel %vm36, %v24, 0.0
  %50 = vadd.xlane.f32.xlu0 %v49
  %v51 = vpop.xlane.xlu0 %50
  %v52 = vsel %vm36, %v25, 0.0
  %53 = vadd.xlane.f32.xlu0 %v52
  %v54 = vpop.xlane.xlu0 %53
  %v55 = vsel %vm36, %v26, 0.0
  %56 = vadd.xlane.f32.xlu0 %v55
  %v57 = vpop.xlane.xlu0 %56
  %v58 = vsel %vm36, %v27, 0.0
  %59 = vadd.xlane.f32.xlu0 %v58
  %v60 = vpop.xlane.xlu0 %59
  %v61 = vsel %vm36, %v28, 0.0
  %62 = vadd.xlane.f32.xlu0 %v61
  %v63 = vpop.xlane.xlu0 %62
  %v64 = vsel %vm36, %v29, 0.0
  %65 = vadd.xlane.f32.xlu0 %v64
  %v66 = vpop.xlane.xlu0 %65
  %v67 = vsel %vm36, %v30, 0.0
  %68 = vadd.xlane.f32.xlu0 %v67
  %v69 = vpop.xlane.xlu0 %68
  %v70 = vsel %vm36, %v31, 0.0
  %71 = vadd.xlane.f32.xlu0 %v70
  %v72 = vpop.xlane.xlu0 %71
  %v73 = vsel %vm36, %v32, 0.0
  %74 = vadd.xlane.f32.xlu0 %v73
  %v75 = vpop.xlane.xlu0 %74
  %v76 = vsel %vm36, %v33, 0.0
  %77 = vadd.xlane.f32.xlu0 %v76
  %v78 = vpop.xlane.xlu0 %77
  %v79 = vsel %vm36, %v34, 0.0
  %80 = vadd.xlane.f32.xlu0 %v79
  %v81 = vpop.xlane.xlu0 %80
  %v82 = vsel %vm36, %v35, 0.0
  %83 = vadd.xlane.f32.xlu0 %v82
  %v84 = vpop.xlane.xlu0 %83
  %v85 = vrcp.pop 16.0
  %v86 = vmul.f32 %v39, %v85
  %v87 = vmul.f32 %v42, %v85
  %v88 = vmul.f32 %v45, %v85
  %v89 = vmul.f32 %v48, %v85
  %v90 = vmul.f32 %v51, %v85
  %v91 = vmul.f32 %v54, %v85
  %v92 = vmul.f32 %v57, %v85
  %v93 = vmul.f32 %v60, %v85
  %v94 = vmul.f32 %v63, %v85
  %v95 = vmul.f32 %v66, %v85
  %v96 = vmul.f32 %v69, %v85
  %v97 = vmul.f32 %v72, %v85
  %v98 = vmul.f32 %v75, %v85
  %v99 = vmul.f32 %v78, %v85
  %v100 = vmul.f32 %v81, %v85
  %v101 = vmul.f32 %v84, %v85
  %v102 = vsub.f32 %v20, %v86
  %v103 = vsub.f32 %v21, %v87
  %v104 = vsub.f32 %v22, %v88
  %v105 = vsub.f32 %v23, %v89
  %v106 = vsub.f32 %v24, %v90
  %v107 = vsub.f32 %v25, %v91
  %v108 = vsub.f32 %v26, %v92
  %v109 = vsub.f32 %v27, %v93
  %v110 = vsub.f32 %v28, %v94
  %v111 = vsub.f32 %v29, %v95
  %v112 = vsub.f32 %v30, %v96
  %v113 = vsub.f32 %v31, %v97
  %v114 = vsub.f32 %v32, %v98
  %v115 = vsub.f32 %v33, %v99
  %v116 = vsub.f32 %v34, %v100
  %v117 = vsub.f32 %v35, %v101
  %v118 = vmul.f32 %v102, %v102
  %v119 = vmul.f32 %v103, %v103
  %v120 = vmul.f32 %v104, %v104
  %v121 = vmul.f32 %v105, %v105
  %v122 = vmul.f32 %v106, %v106
  %v123 = vmul.f32 %v107, %v107
  %v124 = vmul.f32 %v108, %v108
  %v125 = vmul.f32 %v109, %v109
  %v126 = vmul.f32 %v110, %v110
  %v127 = vmul.f32 %v111, %v111
  %v128 = vmul.f32 %v112, %v112
  %v129 = vmul.f32 %v113, %v113
  %v130 = vmul.f32 %v114, %v114
  %v131 = vmul.f32 %v115, %v115
  %v132 = vmul.f32 %v116, %v116
  %v133 = vmul.f32 %v117, %v117
  %v134 = vsel %vm36, %v118, 0.0
  %135 = vadd.xlane.f32.xlu0 %v134
  %v136 = vpop.xlane.xlu0 %135
  %v137 = vsel %vm36, %v119, 0.0
  %138 = vadd.xlane.f32.xlu0 %v137
  %v139 = vpop.xlane.xlu0 %138
  %v140 = vsel %vm36, %v120, 0.0
  %141 = vadd.xlane.f32.xlu0 %v140
  %v142 = vpop.xlane.xlu0 %141
  %v143 = vsel %vm36, %v121, 0.0
  %144 = vadd.xlane.f32.xlu0 %v143
  %v145 = vpop.xlane.xlu0 %144
  %v146 = vsel %vm36, %v122, 0.0
  %147 = vadd.xlane.f32.xlu0 %v146
  %v148 = vpop.xlane.xlu0 %147
  %v149 = vsel %vm36, %v123, 0.0
  %150 = vadd.xlane.f32.xlu0 %v149
  %v151 = vpop.xlane.xlu0 %150
  %v152 = vsel %vm36, %v124, 0.0
  %153 = vadd.xlane.f32.xlu0 %v152
  %v154 = vpop.xlane.xlu0 %153
  %v155 = vsel %vm36, %v125, 0.0
  %156 = vadd.xlane.f32.xlu0 %v155
  %v157 = vpop.xlane.xlu0 %156
  %v158 = vsel %vm36, %v126, 0.0
  %159 = vadd.xlane.f32.xlu0 %v158
  %v160 = vpop.xlane.xlu0 %159
  %v161 = vsel %vm36, %v127, 0.0
  %162 = vadd.xlane.f32.xlu0 %v161
  %v163 = vpop.xlane.xlu0 %162
  %v164 = vsel %vm36, %v128, 0.0
  %165 = vadd.xlane.f32.xlu0 %v164
  %v166 = vpop.xlane.xlu0 %165
  %v167 = vsel %vm36, %v129, 0.0
  %168 = vadd.xlane.f32.xlu0 %v167
  %v169 = vpop.xlane.xlu0 %168
  %v170 = vsel %vm36, %v130, 0.0
  %171 = vadd.xlane.f32.xlu0 %v170
  %v172 = vpop.xlane.xlu0 %171
  %v173 = vsel %vm36, %v131, 0.0
  %174 = vadd.xlane.f32.xlu0 %v173
  %v175 = vpop.xlane.xlu0 %174
  %v176 = vsel %vm36, %v132, 0.0
  %177 = vadd.xlane.f32.xlu0 %v176
  %v178 = vpop.xlane.xlu0 %177
  %v179 = vsel %vm36, %v133, 0.0
  %180 = vadd.xlane.f32.xlu0 %v179
  %v181 = vpop.xlane.xlu0 %180
  %v182 = vmul.f32 %v136, %v85
  %v183 = vmul.f32 %v139, %v85
  %v184 = vmul.f32 %v142, %v85
  %v185 = vmul.f32 %v145, %v85
  %v186 = vmul.f32 %v148, %v85
  %v187 = vmul.f32 %v151, %v85
  %v188 = vmul.f32 %v154, %v85
  %v189 = vmul.f32 %v157, %v85
  %v190 = vmul.f32 %v160, %v85
  %v191 = vmul.f32 %v163, %v85
  %v192 = vmul.f32 %v166, %v85
  %v193 = vmul.f32 %v169, %v85
  %v194 = vmul.f32 %v172, %v85
  %v195 = vmul.f32 %v175, %v85
  %v196 = vmul.f32 %v178, %v85
  %v197 = vmul.f32 %v181, %v85
  %v198 = vadd.f32 %v182, 1e-06
  %v199 = vadd.f32 %v183, 1e-06
  %v200 = vadd.f32 %v184, 1e-06
  %v201 = vadd.f32 %v185, 1e-06
  %v202 = vadd.f32 %v186, 1e-06
  %v203 = vadd.f32 %v187, 1e-06
  %v204 = vadd.f32 %v188, 1e-06
  %v205 = vadd.f32 %v189, 1e-06
  %v206 = vadd.f32 %v190, 1e-06
  %v207 = vadd.f32 %v191, 1e-06
  %v208 = vadd.f32 %v192, 1e-06
  %v209 = vadd.f32 %v193, 1e-06
  %v210 = vadd.f32 %v194, 1e-06
  %v211 = vadd.f32 %v195, 1e-06
  %v212 = vadd.f32 %v196, 1e-06
  %v213 = vadd.f32 %v197, 1e-06
  %v214 = vrsqrt.pop %v198
  %v215 = vrsqrt.pop %v199
  %v216 = vrsqrt.pop %v200
  %v217 = vrsqrt.pop %v201
  %v218 = vrsqrt.pop %v202
  %v219 = vrsqrt.pop %v203
  %v220 = vrsqrt.pop %v204
  %v221 = vrsqrt.pop %v205
  %v222 = vrsqrt.pop %v206
  %v223 = vrsqrt.pop %v207
  %v224 = vrsqrt.pop %v208
  %v225 = vrsqrt.pop %v209
  %v226 = vrsqrt.pop %v210
  %v227 = vrsqrt.pop %v211
  %v228 = vrsqrt.pop %v212
  %v229 = vrsqrt.pop %v213
  %v230 = vmul.f32 %v102, %v214
  %v231 = vmul.f32 %v103, %v215
  %v232 = vmul.f32 %v104, %v216
  %v233 = vmul.f32 %v105, %v217
  %v234 = vmul.f32 %v106, %v218
  %v235 = vmul.f32 %v107, %v219
  %v236 = vmul.f32 %v108, %v220
  %v237 = vmul.f32 %v109, %v221
  %v238 = vmul.f32 %v110, %v222
  %v239 = vmul.f32 %v111, %v223
  %v240 = vmul.f32 %v112, %v224
  %v241 = vmul.f32 %v113, %v225
  %v242 = vmul.f32 %v114, %v226
  %v243 = vmul.f32 %v115, %v227
  %v244 = vmul.f32 %v116, %v228
  %v245 = vmul.f32 %v117, %v229
  %v246 = vld [vmem:[%s1] sm:$0x1]
  %v248 = vlaneseq
  %v249 = vshrl.u32 %v248, 7
  %v250 = vsub.s32 0, %v249
  %v251 = vrot.slane %v246, %v250
  %v253 = vmul.f32 %v230, %v251
  %v254 = vmul.f32 %v231, %v251
  %v255 = vmul.f32 %v232, %v251
  %v256 = vmul.f32 %v233, %v251
  %v257 = vmul.f32 %v234, %v251
  %v258 = vmul.f32 %v235, %v251
  %v259 = vmul.f32 %v236, %v251
  %v260 = vmul.f32 %v237, %v251
  %v261 = vmul.f32 %v238, %v251
  %v262 = vmul.f32 %v239, %v251
  %v263 = vmul.f32 %v240, %v251
  %v264 = vmul.f32 %v241, %v251
  %v265 = vmul.f32 %v242, %v251
  %v266 = vmul.f32 %v243, %v251
  %v267 = vmul.f32 %v244, %v251
  %v268 = vmul.f32 %v245, %v251
  %v269 = vld [vmem:[%s2] sm:$0x1]
  %v271 = vlaneseq
  %v272 = vshrl.u32 %v271, 7
  %v273 = vsub.s32 0, %v272
  %v274 = vrot.slane %v269, %v273
  %v276 = vadd.f32 %v253, %v274
  %v277 = vadd.f32 %v254, %v274
  %v278 = vadd.f32 %v255, %v274
  %v279 = vadd.f32 %v256, %v274
  %v280 = vadd.f32 %v257, %v274
  %v281 = vadd.f32 %v258, %v274
  %v282 = vadd.f32 %v259, %v274
  %v283 = vadd.f32 %v260, %v274
  %v284 = vadd.f32 %v261, %v274
  %v285 = vadd.f32 %v262, %v274
  %v286 = vadd.f32 %v263, %v274
  %v287 = vadd.f32 %v264, %v274
  %v288 = vadd.f32 %v265, %v274
  %v289 = vadd.f32 %v266, %v274
  %v290 = vadd.f32 %v267, %v274
  %v291 = vadd.f32 %v268, %v274
  %v292 = vld [vmem:[%s3] sm:$0xff]
  %v293 = vld [vmem:[%s3 + $0x8] sm:$0xff]
  %v294 = vld [vmem:[%s3 + $0x10] sm:$0xff]
  %v295 = vld [vmem:[%s3 + $0x18] sm:$0xff]
  %v297 = vsel %vm36, %v276, 0
  %v300 = vsel %vm36, %v277, 0
  %v303 = vsel %vm36, %v278, 0
  %v306 = vsel %vm36, %v279, 0
  %v309 = vsel %vm36, %v280, 0
  %v312 = vsel %vm36, %v281, 0
  %v315 = vsel %vm36, %v282, 0
  %v318 = vsel %vm36, %v283, 0
  %v321 = vsel %vm36, %v284, 0
  %v324 = vsel %vm36, %v285, 0
  %v327 = vsel %vm36, %v286, 0
  %v330 = vsel %vm36, %v287, 0
  %v333 = vsel %vm36, %v288, 0
  %v336 = vsel %vm36, %v289, 0
  %v339 = vsel %vm36, %v290, 0
  %v342 = vsel %vm36, %v291, 0
  %v344 = vand.u32 %v293, 4294901760
  %345 = vmatprep.subr.mxu0 %v344
  %v346 = vand.u32 %v292, 4294901760
  %347 = vmatpush1.msra.mxu0 %v346
  %v348 = vand.u32 %v295, 4294901760
  %349 = vmatprep.subr.mxu0 %v348
  %v350 = vand.u32 %v294, 4294901760
  %351 = vmatpush1.msra.mxu0 %v350
  %352 = vmatprep.subr.mxu0 0.0
  %353 = vmatpush1.msra.mxu0 0.0
  %354 = vmatprep.subr.mxu0 0.0
  %355 = vmatpush1.msra.mxu0 0.0
  %356 = vmatprep.subr.mxu0 0.0
  %357 = vmatpush1.msra.mxu0 0.0
  %358 = vmatprep.subr.mxu0 0.0
  %359 = vmatpush1.msra.mxu0 0.0
  %360 = vmatprep.subr.mxu0 0.0
  %361 = vmatpush1.msra.mxu0 0.0
  %362 = vmatprep.subr.mxu0 0.0
  %363 = vmatpush1.msra.mxu0 0.0
  %364 = vmatprep.subr.mxu0 0.0
  %365 = vmatpush1.msra.mxu0 0.0
  %366 = vmatprep.subr.mxu0 0.0
  %367 = vmatpush1.msra.mxu0 0.0
  %368 = vmatprep.subr.mxu0 0.0
  %369 = vmatpush1.msra.mxu0 0.0
  %370 = vmatprep.subr.mxu0 0.0
  %371 = vmatpush1.msra.mxu0 0.0
  %372 = vmatprep.subr.mxu0 0.0
  %373 = vmatpush1.msra.mxu0 0.0
  %374 = vmatprep.subr.mxu0 0.0
  %375 = vmatpush1.msra.mxu0 0.0
  %376 = vmatprep.subr.mxu0 0.0
  %377 = vmatpush1.msra.mxu0 0.0
  %378 = vmatprep.subr.mxu0 0.0
  %379 = vmatpush1.msra.mxu0 0.0
  %380 = vmatprep.subr.mxu0 0.0
  %381 = vmatpush1.msra.mxu0 0.0
  %382 = vmatprep.subr.mxu0 0.0
  %383 = vmatpush1.msra.mxu0 0.0
  %384 = vmatprep.subr.mxu0 0.0
  %385 = vmatpush1.msra.mxu0 0.0
  %386 = vmatprep.subr.mxu0 0.0
  %387 = vmatpush1.msra.mxu0 0.0
  %388 = vmatprep.subr.mxu0 0.0
  %389 = vmatpush1.msra.mxu0 0.0
  %390 = vmatprep.subr.mxu0 0.0
  %391 = vmatpush1.msra.mxu0 0.0
  %392 = vmatprep.subr.mxu0 0.0
  %393 = vmatpush1.msra.mxu0 0.0
  %394 = vmatprep.subr.mxu0 0.0
  %395 = vmatpush1.msra.mxu0 0.0
  %396 = vmatprep.subr.mxu0 0.0
  %397 = vmatpush1.msra.mxu0 0.0
  %398 = vmatprep.subr.mxu0 0.0
  %399 = vmatpush1.msra.mxu0 0.0
  %400 = vmatprep.subr.mxu0 0.0
  %401 = vmatpush1.msra.mxu0 0.0
  %402 = vmatprep.subr.mxu0 0.0
  %403 = vmatpush1.msra.mxu0 0.0
  %404 = vmatprep.subr.mxu0 0.0
  %405 = vmatpush1.msra.mxu0 0.0
  %406 = vmatprep.subr.mxu0 0.0
  %407 = vmatpush1.msra.mxu0 0.0
  %408 = vmatprep.subr.mxu0 0.0
  %409 = vmatpush1.msra.mxu0 0.0
  %410 = vmatprep.subr.mxu0 0.0
  %411 = vmatpush1.msra.mxu0 0.0
  %412 = vmatprep.mubr.f32.mxu0 0.0
  %v413 = vand.u32 %v297, 4294901760
  %v414 = vsub.f32 %v297, %v413
  %v415 = vand.u32 %v414, 4294901760
  %v416 = vsub.f32 %v414, %v415
  %v417 = vand.u32 %v416, 4294901760
  %418 = vmatmul.mubr.f32.gmra.mrb[0].mxu0 %v417
  %v419 = vpop.f32.mrb[0].mxu0
  %v420 = vadd.f32 0.0, %v419
  %v421 = vpop.f32.mrb[0].mxu0
  %v422 = vadd.f32 0.0, %v421
  %423 = vmatprep.mubr.f32.mxu0 0.0
  %v424 = vand.u32 %v300, 4294901760
  %v425 = vsub.f32 %v300, %v424
  %v426 = vand.u32 %v425, 4294901760
  %v427 = vsub.f32 %v425, %v426
  %v428 = vand.u32 %v427, 4294901760
  %429 = vmatmul.mubr.f32.gmra.mrb[0].mxu0 %v428
  %v430 = vpop.f32.mrb[0].mxu0
  %v431 = vadd.f32 0.0, %v430
  %v432 = vpop.f32.mrb[0].mxu0
  %v433 = vadd.f32 0.0, %v432
  %434 = vmatprep.mubr.f32.mxu0 0.0
  %v435 = vand.u32 %v303, 4294901760
  %v436 = vsub.f32 %v303, %v435
  %v437 = vand.u32 %v436, 4294901760
  %v438 = vsub.f32 %v436, %v437
  %v439 = vand.u32 %v438, 4294901760
  %440 = vmatmul.mubr.f32.gmra.mrb[0].mxu0 %v439
  %v441 = vpop.f32.mrb[0].mxu0
  %v442 = vadd.f32 0.0, %v441
  %v443 = vpop.f32.mrb[0].mxu0
  %v444 = vadd.f32 0.0, %v443
  %445 = vmatprep.mubr.f32.mxu0 0.0
  %v446 = vand.u32 %v306, 4294901760
  %v447 = vsub.f32 %v306, %v446
  %v448 = vand.u32 %v447, 4294901760
  %v449 = vsub.f32 %v447, %v448
  %v450 = vand.u32 %v449, 4294901760
  %451 = vmatmul.mubr.f32.gmra.mrb[0].mxu0 %v450
  %v452 = vpop.f32.mrb[0].mxu0
  %v453 = vadd.f32 0.0, %v452
  %v454 = vpop.f32.mrb[0].mxu0
  %v455 = vadd.f32 0.0, %v454
  %456 = vmatprep.mubr.f32.mxu0 0.0
  %v457 = vand.u32 %v309, 4294901760
  %v458 = vsub.f32 %v309, %v457
  %v459 = vand.u32 %v458, 4294901760
  %v460 = vsub.f32 %v458, %v459
  %v461 = vand.u32 %v460, 4294901760
  %462 = vmatmul.mubr.f32.gmra.mrb[0].mxu0 %v461
  %v463 = vpop.f32.mrb[0].mxu0
  %v464 = vadd.f32 0.0, %v463
  %v465 = vpop.f32.mrb[0].mxu0
  %v466 = vadd.f32 0.0, %v465
  %467 = vmatprep.mubr.f32.mxu0 0.0
  %v468 = vand.u32 %v312, 4294901760
  %v469 = vsub.f32 %v312, %v468
  %v470 = vand.u32 %v469, 4294901760
  %v471 = vsub.f32 %v469, %v470
  %v472 = vand.u32 %v471, 4294901760
  %473 = vmatmul.mubr.f32.gmra.mrb[0].mxu0 %v472
  %v474 = vpop.f32.mrb[0].mxu0
  %v475 = vadd.f32 0.0, %v474
  %v476 = vpop.f32.mrb[0].mxu0
  %v477 = vadd.f32 0.0, %v476
  %478 = vmatprep.mubr.f32.mxu0 0.0
  %v479 = vand.u32 %v315, 4294901760
  %v480 = vsub.f32 %v315, %v479
  %v481 = vand.u32 %v480, 4294901760
  %v482 = vsub.f32 %v480, %v481
  %v483 = vand.u32 %v482, 4294901760
  %484 = vmatmul.mubr.f32.gmra.mrb[0].mxu0 %v483
  %v485 = vpop.f32.mrb[0].mxu0
  %v486 = vadd.f32 0.0, %v485
  %v487 = vpop.f32.mrb[0].mxu0
  %v488 = vadd.f32 0.0, %v487
  %489 = vmatprep.mubr.f32.mxu0 0.0
  %v490 = vand.u32 %v318, 4294901760
  %v491 = vsub.f32 %v318, %v490
  %v492 = vand.u32 %v491, 4294901760
  %v493 = vsub.f32 %v491, %v492
  %v494 = vand.u32 %v493, 4294901760
  %495 = vmatmul.mubr.f32.gmra.mrb[0].mxu0 %v494
  %v496 = vpop.f32.mrb[0].mxu0
  %v497 = vadd.f32 0.0, %v496
  %v498 = vpop.f32.mrb[0].mxu0
  %v499 = vadd.f32 0.0, %v498
  %500 = vmatprep.mubr.f32.mxu0 0.0
  %v501 = vand.u32 %v321, 4294901760
  %v502 = vsub.f32 %v321, %v501
  %v503 = vand.u32 %v502, 4294901760
  %v504 = vsub.f32 %v502, %v503
  %v505 = vand.u32 %v504, 4294901760
  %506 = vmatmul.mubr.f32.gmra.mrb[0].mxu0 %v505
  %v507 = vpop.f32.mrb[0].mxu0
  %v508 = vadd.f32 0.0, %v507
  %v509 = vpop.f32.mrb[0].mxu0
  %v510 = vadd.f32 0.0, %v509
  %511 = vmatprep.mubr.f32.mxu0 0.0
  %v512 = vand.u32 %v324, 4294901760
  %v513 = vsub.f32 %v324, %v512
  %v514 = vand.u32 %v513, 4294901760
  %v515 = vsub.f32 %v513, %v514
  %v516 = vand.u32 %v515, 4294901760
  %517 = vmatmul.mubr.f32.gmra.mrb[0].mxu0 %v516
  %v518 = vpop.f32.mrb[0].mxu0
  %v519 = vadd.f32 0.0, %v518
  %v520 = vpop.f32.mrb[0].mxu0
  %v521 = vadd.f32 0.0, %v520
  %522 = vmatprep.mubr.f32.mxu0 0.0
  %v523 = vand.u32 %v327, 4294901760
  %v524 = vsub.f32 %v327, %v523
  %v525 = vand.u32 %v524, 4294901760
  %v526 = vsub.f32 %v524, %v525
  %v527 = vand.u32 %v526, 4294901760
  %528 = vmatmul.mubr.f32.gmra.mrb[0].mxu0 %v527
  %v529 = vpop.f32.mrb[0].mxu0
  %v530 = vadd.f32 0.0, %v529
  %v531 = vpop.f32.mrb[0].mxu0
  %v532 = vadd.f32 0.0, %v531
  %533 = vmatprep.mubr.f32.mxu0 0.0
  %v534 = vand.u32 %v330, 4294901760
  %v535 = vsub.f32 %v330, %v534
  %v536 = vand.u32 %v535, 4294901760
  %v537 = vsub.f32 %v535, %v536
  %v538 = vand.u32 %v537, 4294901760
  %539 = vmatmul.mubr.f32.gmra.mrb[0].mxu0 %v538
  %v540 = vpop.f32.mrb[0].mxu0
  %v541 = vadd.f32 0.0, %v540
  %v542 = vpop.f32.mrb[0].mxu0
  %v543 = vadd.f32 0.0, %v542
  %544 = vmatprep.mubr.f32.mxu0 0.0
  %v545 = vand.u32 %v333, 4294901760
  %v546 = vsub.f32 %v333, %v545
  %v547 = vand.u32 %v546, 4294901760
  %v548 = vsub.f32 %v546, %v547
  %v549 = vand.u32 %v548, 4294901760
  %550 = vmatmul.mubr.f32.gmra.mrb[0].mxu0 %v549
  %v551 = vpop.f32.mrb[0].mxu0
  %v552 = vadd.f32 0.0, %v551
  %v553 = vpop.f32.mrb[0].mxu0
  %v554 = vadd.f32 0.0, %v553
  %555 = vmatprep.mubr.f32.mxu0 0.0
  %v556 = vand.u32 %v336, 4294901760
  %v557 = vsub.f32 %v336, %v556
  %v558 = vand.u32 %v557, 4294901760
  %v559 = vsub.f32 %v557, %v558
  %v560 = vand.u32 %v559, 4294901760
  %561 = vmatmul.mubr.f32.gmra.mrb[0].mxu0 %v560
  %v562 = vpop.f32.mrb[0].mxu0
  %v563 = vadd.f32 0.0, %v562
  %v564 = vpop.f32.mrb[0].mxu0
  %v565 = vadd.f32 0.0, %v564
  %566 = vmatprep.mubr.f32.mxu0 0.0
  %v567 = vand.u32 %v339, 4294901760
  %v568 = vsub.f32 %v339, %v567
  %v569 = vand.u32 %v568, 4294901760
  %v570 = vsub.f32 %v568, %v569
  %v571 = vand.u32 %v570, 4294901760
  %572 = vmatmul.mubr.f32.gmra.mrb[0].mxu0 %v571
  %v573 = vpop.f32.mrb[0].mxu0
  %v574 = vadd.f32 0.0, %v573
  %v575 = vpop.f32.mrb[0].mxu0
  %v576 = vadd.f32 0.0, %v575
  %577 = vmatprep.mubr.f32.mxu0 0.0
  %v578 = vand.u32 %v342, 4294901760
  %v579 = vsub.f32 %v342, %v578
  %v580 = vand.u32 %v579, 4294901760
  %v581 = vsub.f32 %v579, %v580
  %v582 = vand.u32 %v581, 4294901760
  %583 = vmatmul.mubr.f32.gmra.mrb[0].mxu0 %v582
  %v584 = vpop.f32.mrb[0].mxu0
  %v585 = vadd.f32 0.0, %v584
  %v586 = vpop.f32.mrb[0].mxu0
  %v587 = vadd.f32 0.0, %v586
  %588 = vdwg.mxu0
  %v589 = vand.u32 %v293, 4294901760
  %v590 = vsub.f32 %v293, %v589
  %v591 = vand.u32 %v590, 4294901760
  %v592 = vsub.f32 %v590, %v591
  %v593 = vand.u32 %v592, 4294901760
  %594 = vmatprep.subr.mxu0 %v593
  %v595 = vand.u32 %v292, 4294901760
  %v596 = vsub.f32 %v292, %v595
  %v597 = vand.u32 %v596, 4294901760
  %v598 = vsub.f32 %v596, %v597
  %v599 = vand.u32 %v598, 4294901760
  %600 = vmatpush1.msra.mxu0 %v599
  %v601 = vand.u32 %v295, 4294901760
  %v602 = vsub.f32 %v295, %v601
  %v603 = vand.u32 %v602, 4294901760
  %v604 = vsub.f32 %v602, %v603
  %v605 = vand.u32 %v604, 4294901760
  %606 = vmatprep.subr.mxu0 %v605
  %v607 = vand.u32 %v294, 4294901760
  %v608 = vsub.f32 %v294, %v607
  %v609 = vand.u32 %v608, 4294901760
  %v610 = vsub.f32 %v608, %v609
  %v611 = vand.u32 %v610, 4294901760
  %612 = vmatpush1.msra.mxu0 %v611
  %613 = vmatprep.subr.mxu0 0.0
  %614 = vmatpush1.msra.mxu0 0.0
  %615 = vmatprep.subr.mxu0 0.0
  %616 = vmatpush1.msra.mxu0 0.0
  %617 = vmatprep.subr.mxu0 0.0
  %618 = vmatpush1.msra.mxu0 0.0
  %619 = vmatprep.subr.mxu0 0.0
  %620 = vmatpush1.msra.mxu0 0.0
  %621 = vmatprep.subr.mxu0 0.0
  %622 = vmatpush1.msra.mxu0 0.0
  %623 = vmatprep.subr.mxu0 0.0
  %624 = vmatpush1.msra.mxu0 0.0
  %625 = vmatprep.subr.mxu0 0.0
  %626 = vmatpush1.msra.mxu0 0.0
  %627 = vmatprep.subr.mxu0 0.0
  %628 = vmatpush1.msra.mxu0 0.0
  %629 = vmatprep.subr.mxu0 0.0
  %630 = vmatpush1.msra.mxu0 0.0
  %631 = vmatprep.subr.mxu0 0.0
  %632 = vmatpush1.msra.mxu0 0.0
  %633 = vmatprep.subr.mxu0 0.0
  %634 = vmatpush1.msra.mxu0 0.0
  %635 = vmatprep.subr.mxu0 0.0
  %636 = vmatpush1.msra.mxu0 0.0
  %637 = vmatprep.subr.mxu0 0.0
  %638 = vmatpush1.msra.mxu0 0.0
  %639 = vmatprep.subr.mxu0 0.0
  %640 = vmatpush1.msra.mxu0 0.0
  %641 = vmatprep.subr.mxu0 0.0
  %642 = vmatpush1.msra.mxu0 0.0
  %643 = vmatprep.subr.mxu0 0.0
  %644 = vmatpush1.msra.mxu0 0.0
  %645 = vmatprep.subr.mxu0 0.0
  %646 = vmatpush1.msra.mxu0 0.0
  %647 = vmatprep.subr.mxu0 0.0
  %648 = vmatpush1.msra.mxu0 0.0
  %649 = vmatprep.subr.mxu0 0.0
  %650 = vmatpush1.msra.mxu0 0.0
  %651 = vmatprep.subr.mxu0 0.0
  %652 = vmatpush1.msra.mxu0 0.0
  %653 = vmatprep.subr.mxu0 0.0
  %654 = vmatpush1.msra.mxu0 0.0
  %655 = vmatprep.subr.mxu0 0.0
  %656 = vmatpush1.msra.mxu0 0.0
  %657 = vmatprep.subr.mxu0 0.0
  %658 = vmatpush1.msra.mxu0 0.0
  %659 = vmatprep.subr.mxu0 0.0
  %660 = vmatpush1.msra.mxu0 0.0
  %661 = vmatprep.subr.mxu0 0.0
  %662 = vmatpush1.msra.mxu0 0.0
  %663 = vmatprep.subr.mxu0 0.0
  %664 = vmatpush1.msra.mxu0 0.0
  %665 = vmatprep.subr.mxu0 0.0
  %666 = vmatpush1.msra.mxu0 0.0
  %667 = vmatprep.subr.mxu0 0.0
  %668 = vmatpush1.msra.mxu0 0.0
  %669 = vmatprep.subr.mxu0 0.0
  %670 = vmatpush1.msra.mxu0 0.0
  %671 = vmatprep.subr.mxu0 0.0
  %672 = vmatpush1.msra.mxu0 0.0
  %673 = vmatprep.mubr.f32.mxu0 0.0
  %v674 = vand.u32 %v297, 4294901760
  %675 = vmatmul.mubr.f32.gmra.mrb[0].mxu0 %v674
  %v676 = vpop.f32.mrb[0].mxu0
  %v677 = vadd.f32 %v420, %v676
  %v678 = vpop.f32.mrb[0].mxu0
  %v679 = vadd.f32 %v422, %v678
  %680 = vmatprep.mubr.f32.mxu0 0.0
  %v681 = vand.u32 %v300, 4294901760
  %682 = vmatmul.mubr.f32.gmra.mrb[0].mxu0 %v681
  %v683 = vpop.f32.mrb[0].mxu0
  %v684 = vadd.f32 %v431, %v683
  %v685 = vpop.f32.mrb[0].mxu0
  %v686 = vadd.f32 %v433, %v685
  %687 = vmatprep.mubr.f32.mxu0 0.0
  %v688 = vand.u32 %v303, 4294901760
  %689 = vmatmul.mubr.f32.gmra.mrb[0].mxu0 %v688
  %v690 = vpop.f32.mrb[0].mxu0
  %v691 = vadd.f32 %v442, %v690
  %v692 = vpop.f32.mrb[0].mxu0
  %v693 = vadd.f32 %v444, %v692
  %694 = vmatprep.mubr.f32.mxu0 0.0
  %v695 = vand.u32 %v306, 4294901760
  %696 = vmatmul.mubr.f32.gmra.mrb[0].mxu0 %v695
  %v697 = vpop.f32.mrb[0].mxu0
  %v698 = vadd.f32 %v453, %v697
  %v699 = vpop.f32.mrb[0].mxu0
  %v700 = vadd.f32 %v455, %v699
  %701 = vmatprep.mubr.f32.mxu0 0.0
  %v702 = vand.u32 %v309, 4294901760
  %703 = vmatmul.mubr.f32.gmra.mrb[0].mxu0 %v702
  %v704 = vpop.f32.mrb[0].mxu0
  %v705 = vadd.f32 %v464, %v704
  %v706 = vpop.f32.mrb[0].mxu0
  %v707 = vadd.f32 %v466, %v706
  %708 = vmatprep.mubr.f32.mxu0 0.0
  %v709 = vand.u32 %v312, 4294901760
  %710 = vmatmul.mubr.f32.gmra.mrb[0].mxu0 %v709
  %v711 = vpop.f32.mrb[0].mxu0
  %v712 = vadd.f32 %v475, %v711
  %v713 = vpop.f32.mrb[0].mxu0
  %v714 = vadd.f32 %v477, %v713
  %715 = vmatprep.mubr.f32.mxu0 0.0
  %v716 = vand.u32 %v315, 4294901760
  %717 = vmatmul.mubr.f32.gmra.mrb[0].mxu0 %v716
  %v718 = vpop.f32.mrb[0].mxu0
  %v719 = vadd.f32 %v486, %v718
  %v720 = vpop.f32.mrb[0].mxu0
  %v721 = vadd.f32 %v488, %v720
  %722 = vmatprep.mubr.f32.mxu0 0.0
  %v723 = vand.u32 %v318, 4294901760
  %724 = vmatmul.mubr.f32.gmra.mrb[0].mxu0 %v723
  %v725 = vpop.f32.mrb[0].mxu0
  %v726 = vadd.f32 %v497, %v725
  %v727 = vpop.f32.mrb[0].mxu0
  %v728 = vadd.f32 %v499, %v727
  %729 = vmatprep.mubr.f32.mxu0 0.0
  %v730 = vand.u32 %v321, 4294901760
  %731 = vmatmul.mubr.f32.gmra.mrb[0].mxu0 %v730
  %v732 = vpop.f32.mrb[0].mxu0
  %v733 = vadd.f32 %v508, %v732
  %v734 = vpop.f32.mrb[0].mxu0
  %v735 = vadd.f32 %v510, %v734
  %736 = vmatprep.mubr.f32.mxu0 0.0
  %v737 = vand.u32 %v324, 4294901760
  %738 = vmatmul.mubr.f32.gmra.mrb[0].mxu0 %v737
  %v739 = vpop.f32.mrb[0].mxu0
  %v740 = vadd.f32 %v519, %v739
  %v741 = vpop.f32.mrb[0].mxu0
  %v742 = vadd.f32 %v521, %v741
  %743 = vmatprep.mubr.f32.mxu0 0.0
  %v744 = vand.u32 %v327, 4294901760
  %745 = vmatmul.mubr.f32.gmra.mrb[0].mxu0 %v744
  %v746 = vpop.f32.mrb[0].mxu0
  %v747 = vadd.f32 %v530, %v746
  %v748 = vpop.f32.mrb[0].mxu0
  %v749 = vadd.f32 %v532, %v748
  %750 = vmatprep.mubr.f32.mxu0 0.0
  %v751 = vand.u32 %v330, 4294901760
  %752 = vmatmul.mubr.f32.gmra.mrb[0].mxu0 %v751
  %v753 = vpop.f32.mrb[0].mxu0
  %v754 = vadd.f32 %v541, %v753
  %v755 = vpop.f32.mrb[0].mxu0
  %v756 = vadd.f32 %v543, %v755
  %757 = vmatprep.mubr.f32.mxu0 0.0
  %v758 = vand.u32 %v333, 4294901760
  %759 = vmatmul.mubr.f32.gmra.mrb[0].mxu0 %v758
  %v760 = vpop.f32.mrb[0].mxu0
  %v761 = vadd.f32 %v552, %v760
  %v762 = vpop.f32.mrb[0].mxu0
  %v763 = vadd.f32 %v554, %v762
  %764 = vmatprep.mubr.f32.mxu0 0.0
  %v765 = vand.u32 %v336, 4294901760
  %766 = vmatmul.mubr.f32.gmra.mrb[0].mxu0 %v765
  %v767 = vpop.f32.mrb[0].mxu0
  %v768 = vadd.f32 %v563, %v767
  %v769 = vpop.f32.mrb[0].mxu0
  %v770 = vadd.f32 %v565, %v769
  %771 = vmatprep.mubr.f32.mxu0 0.0
  %v772 = vand.u32 %v339, 4294901760
  %773 = vmatmul.mubr.f32.gmra.mrb[0].mxu0 %v772
  %v774 = vpop.f32.mrb[0].mxu0
  %v775 = vadd.f32 %v574, %v774
  %v776 = vpop.f32.mrb[0].mxu0
  %v777 = vadd.f32 %v576, %v776
  %778 = vmatprep.mubr.f32.mxu0 0.0
  %v779 = vand.u32 %v342, 4294901760
  %780 = vmatmul.mubr.f32.gmra.mrb[0].mxu0 %v779
  %v781 = vpop.f32.mrb[0].mxu0
  %v782 = vadd.f32 %v585, %v781
  %v783 = vpop.f32.mrb[0].mxu0
  %v784 = vadd.f32 %v587, %v783
  %785 = vdwg.mxu0
  %v786 = vand.u32 %v293, 4294901760
  %v787 = vsub.f32 %v293, %v786
  %788 = vmatprep.subr.mxu0 %v787
  %v789 = vand.u32 %v292, 4294901760
  %v790 = vsub.f32 %v292, %v789
  %791 = vmatpush1.msra.mxu0 %v790
  %v792 = vand.u32 %v295, 4294901760
  %v793 = vsub.f32 %v295, %v792
  %794 = vmatprep.subr.mxu0 %v793
  %v795 = vand.u32 %v294, 4294901760
  %v796 = vsub.f32 %v294, %v795
  %797 = vmatpush1.msra.mxu0 %v796
  %798 = vmatprep.subr.mxu0 0.0
  %799 = vmatpush1.msra.mxu0 0.0
  %800 = vmatprep.subr.mxu0 0.0
  %801 = vmatpush1.msra.mxu0 0.0
  %802 = vmatprep.subr.mxu0 0.0
  %803 = vmatpush1.msra.mxu0 0.0
  %804 = vmatprep.subr.mxu0 0.0
  %805 = vmatpush1.msra.mxu0 0.0
  %806 = vmatprep.subr.mxu0 0.0
  %807 = vmatpush1.msra.mxu0 0.0
  %808 = vmatprep.subr.mxu0 0.0
  %809 = vmatpush1.msra.mxu0 0.0
  %810 = vmatprep.subr.mxu0 0.0
  %811 = vmatpush1.msra.mxu0 0.0
  %812 = vmatprep.subr.mxu0 0.0
  %813 = vmatpush1.msra.mxu0 0.0
  %814 = vmatprep.subr.mxu0 0.0
  %815 = vmatpush1.msra.mxu0 0.0
  %816 = vmatprep.subr.mxu0 0.0
  %817 = vmatpush1.msra.mxu0 0.0
  %818 = vmatprep.subr.mxu0 0.0
  %819 = vmatpush1.msra.mxu0 0.0
  %820 = vmatprep.subr.mxu0 0.0
  %821 = vmatpush1.msra.mxu0 0.0
  %822 = vmatprep.subr.mxu0 0.0
  %823 = vmatpush1.msra.mxu0 0.0
  %824 = vmatprep.subr.mxu0 0.0
  %825 = vmatpush1.msra.mxu0 0.0
  %826 = vmatprep.subr.mxu0 0.0
  %827 = vmatpush1.msra.mxu0 0.0
  %828 = vmatprep.subr.mxu0 0.0
  %829 = vmatpush1.msra.mxu0 0.0
  %830 = vmatprep.subr.mxu0 0.0
  %831 = vmatpush1.msra.mxu0 0.0
  %832 = vmatprep.subr.mxu0 0.0
  %833 = vmatpush1.msra.mxu0 0.0
  %834 = vmatprep.subr.mxu0 0.0
  %835 = vmatpush1.msra.mxu0 0.0
  %836 = vmatprep.subr.mxu0 0.0
  %837 = vmatpush1.msra.mxu0 0.0
  %838 = vmatprep.subr.mxu0 0.0
  %839 = vmatpush1.msra.mxu0 0.0
  %840 = vmatprep.subr.mxu0 0.0
  %841 = vmatpush1.msra.mxu0 0.0
  %842 = vmatprep.subr.mxu0 0.0
  %843 = vmatpush1.msra.mxu0 0.0
  %844 = vmatprep.subr.mxu0 0.0
  %845 = vmatpush1.msra.mxu0 0.0
  %846 = vmatprep.subr.mxu0 0.0
  %847 = vmatpush1.msra.mxu0 0.0
  %848 = vmatprep.subr.mxu0 0.0
  %849 = vmatpush1.msra.mxu0 0.0
  %850 = vmatprep.subr.mxu0 0.0
  %851 = vmatpush1.msra.mxu0 0.0
  %852 = vmatprep.subr.mxu0 0.0
  %853 = vmatpush1.msra.mxu0 0.0
  %854 = vmatprep.subr.mxu0 0.0
  %855 = vmatpush1.msra.mxu0 0.0
  %856 = vmatprep.subr.mxu0 0.0
  %857 = vmatpush1.msra.mxu0 0.0
  %858 = vmatprep.mubr.f32.mxu0 0.0
  %v859 = vand.u32 %v297, 4294901760
  %v860 = vsub.f32 %v297, %v859
  %861 = vmatmul.mubr.f32.gmra.mrb[0].mxu0 %v860
  %v862 = vpop.f32.mrb[0].mxu0
  %v863 = vadd.f32 %v677, %v862
  %v864 = vpop.f32.mrb[0].mxu0
  %v865 = vadd.f32 %v679, %v864
  %866 = vmatprep.mubr.f32.mxu0 0.0
  %v867 = vand.u32 %v300, 4294901760
  %v868 = vsub.f32 %v300, %v867
  %869 = vmatmul.mubr.f32.gmra.mrb[0].mxu0 %v868
  %v870 = vpop.f32.mrb[0].mxu0
  %v871 = vadd.f32 %v684, %v870
  %v872 = vpop.f32.mrb[0].mxu0
  %v873 = vadd.f32 %v686, %v872
  %874 = vmatprep.mubr.f32.mxu0 0.0
  %v875 = vand.u32 %v303, 4294901760
  %v876 = vsub.f32 %v303, %v875
  %877 = vmatmul.mubr.f32.gmra.mrb[0].mxu0 %v876
  %v878 = vpop.f32.mrb[0].mxu0
  %v879 = vadd.f32 %v691, %v878
  %v880 = vpop.f32.mrb[0].mxu0
  %v881 = vadd.f32 %v693, %v880
  %882 = vmatprep.mubr.f32.mxu0 0.0
  %v883 = vand.u32 %v306, 4294901760
  %v884 = vsub.f32 %v306, %v883
  %885 = vmatmul.mubr.f32.gmra.mrb[0].mxu0 %v884
  %v886 = vpop.f32.mrb[0].mxu0
  %v887 = vadd.f32 %v698, %v886
  %v888 = vpop.f32.mrb[0].mxu0
  %v889 = vadd.f32 %v700, %v888
  %890 = vmatprep.mubr.f32.mxu0 0.0
  %v891 = vand.u32 %v309, 4294901760
  %v892 = vsub.f32 %v309, %v891
  %893 = vmatmul.mubr.f32.gmra.mrb[0].mxu0 %v892
  %v894 = vpop.f32.mrb[0].mxu0
  %v895 = vadd.f32 %v705, %v894
  %v896 = vpop.f32.mrb[0].mxu0
  %v897 = vadd.f32 %v707, %v896
  %898 = vmatprep.mubr.f32.mxu0 0.0
  %v899 = vand.u32 %v312, 4294901760
  %v900 = vsub.f32 %v312, %v899
  %901 = vmatmul.mubr.f32.gmra.mrb[0].mxu0 %v900
  %v902 = vpop.f32.mrb[0].mxu0
  %v903 = vadd.f32 %v712, %v902
  %v904 = vpop.f32.mrb[0].mxu0
  %v905 = vadd.f32 %v714, %v904
  %906 = vmatprep.mubr.f32.mxu0 0.0
  %v907 = vand.u32 %v315, 4294901760
  %v908 = vsub.f32 %v315, %v907
  %909 = vmatmul.mubr.f32.gmra.mrb[0].mxu0 %v908
  %v910 = vpop.f32.mrb[0].mxu0
  %v911 = vadd.f32 %v719, %v910
  %v912 = vpop.f32.mrb[0].mxu0
  %v913 = vadd.f32 %v721, %v912
  %914 = vmatprep.mubr.f32.mxu0 0.0
  %v915 = vand.u32 %v318, 4294901760
  %v916 = vsub.f32 %v318, %v915
  %917 = vmatmul.mubr.f32.gmra.mrb[0].mxu0 %v916
  %v918 = vpop.f32.mrb[0].mxu0
  %v919 = vadd.f32 %v726, %v918
  %v920 = vpop.f32.mrb[0].mxu0
  %v921 = vadd.f32 %v728, %v920
  %922 = vmatprep.mubr.f32.mxu0 0.0
  %v923 = vand.u32 %v321, 4294901760
  %v924 = vsub.f32 %v321, %v923
  %925 = vmatmul.mubr.f32.gmra.mrb[0].mxu0 %v924
  %v926 = vpop.f32.mrb[0].mxu0
  %v927 = vadd.f32 %v733, %v926
  %v928 = vpop.f32.mrb[0].mxu0
  %v929 = vadd.f32 %v735, %v928
  %930 = vmatprep.mubr.f32.mxu0 0.0
  %v931 = vand.u32 %v324, 4294901760
  %v932 = vsub.f32 %v324, %v931
  %933 = vmatmul.mubr.f32.gmra.mrb[0].mxu0 %v932
  %v934 = vpop.f32.mrb[0].mxu0
  %v935 = vadd.f32 %v740, %v934
  %v936 = vpop.f32.mrb[0].mxu0
  %v937 = vadd.f32 %v742, %v936
  %938 = vmatprep.mubr.f32.mxu0 0.0
  %v939 = vand.u32 %v327, 4294901760
  %v940 = vsub.f32 %v327, %v939
  %941 = vmatmul.mubr.f32.gmra.mrb[0].mxu0 %v940
  %v942 = vpop.f32.mrb[0].mxu0
  %v943 = vadd.f32 %v747, %v942
  %v944 = vpop.f32.mrb[0].mxu0
  %v945 = vadd.f32 %v749, %v944
  %946 = vmatprep.mubr.f32.mxu0 0.0
  %v947 = vand.u32 %v330, 4294901760
  %v948 = vsub.f32 %v330, %v947
  %949 = vmatmul.mubr.f32.gmra.mrb[0].mxu0 %v948
  %v950 = vpop.f32.mrb[0].mxu0
  %v951 = vadd.f32 %v754, %v950
  %v952 = vpop.f32.mrb[0].mxu0
  %v953 = vadd.f32 %v756, %v952
  %954 = vmatprep.mubr.f32.mxu0 0.0
  %v955 = vand.u32 %v333, 4294901760
  %v956 = vsub.f32 %v333, %v955
  %957 = vmatmul.mubr.f32.gmra.mrb[0].mxu0 %v956
  %v958 = vpop.f32.mrb[0].mxu0
  %v959 = vadd.f32 %v761, %v958
  %v960 = vpop.f32.mrb[0].mxu0
  %v961 = vadd.f32 %v763, %v960
  %962 = vmatprep.mubr.f32.mxu0 0.0
  %v963 = vand.u32 %v336, 4294901760
  %v964 = vsub.f32 %v336, %v963
  %965 = vmatmul.mubr.f32.gmra.mrb[0].mxu0 %v964
  %v966 = vpop.f32.mrb[0].mxu0
  %v967 = vadd.f32 %v768, %v966
  %v968 = vpop.f32.mrb[0].mxu0
  %v969 = vadd.f32 %v770, %v968
  %970 = vmatprep.mubr.f32.mxu0 0.0
  %v971 = vand.u32 %v339, 4294901760
  %v972 = vsub.f32 %v339, %v971
  %973 = vmatmul.mubr.f32.gmra.mrb[0].mxu0 %v972
  %v974 = vpop.f32.mrb[0].mxu0
  %v975 = vadd.f32 %v775, %v974
  %v976 = vpop.f32.mrb[0].mxu0
  %v977 = vadd.f32 %v777, %v976
  %978 = vmatprep.mubr.f32.mxu0 0.0
  %v979 = vand.u32 %v342, 4294901760
  %v980 = vsub.f32 %v342, %v979
  %981 = vmatmul.mubr.f32.gmra.mrb[0].mxu0 %v980
  %v982 = vpop.f32.mrb[0].mxu0
  %v983 = vadd.f32 %v782, %v982
  %v984 = vpop.f32.mrb[0].mxu0
  %v985 = vadd.f32 %v784, %v984
  %986 = vdwg.mxu0
  %v987 = vand.u32 %v293, 4294901760
  %988 = vmatprep.subr.mxu0 %v987
  %v989 = vand.u32 %v292, 4294901760
  %990 = vmatpush1.msra.mxu0 %v989
  %v991 = vand.u32 %v295, 4294901760
  %992 = vmatprep.subr.mxu0 %v991
  %v993 = vand.u32 %v294, 4294901760
  %994 = vmatpush1.msra.mxu0 %v993
  %995 = vmatprep.subr.mxu0 0.0
  %996 = vmatpush1.msra.mxu0 0.0
  %997 = vmatprep.subr.mxu0 0.0
  %998 = vmatpush1.msra.mxu0 0.0
  %999 = vmatprep.subr.mxu0 0.0
  %1000 = vmatpush1.msra.mxu0 0.0
  %1001 = vmatprep.subr.mxu0 0.0
  %1002 = vmatpush1.msra.mxu0 0.0
  %1003 = vmatprep.subr.mxu0 0.0
  %1004 = vmatpush1.msra.mxu0 0.0
  %1005 = vmatprep.subr.mxu0 0.0
  %1006 = vmatpush1.msra.mxu0 0.0
  %1007 = vmatprep.subr.mxu0 0.0
  %1008 = vmatpush1.msra.mxu0 0.0
  %1009 = vmatprep.subr.mxu0 0.0
  %1010 = vmatpush1.msra.mxu0 0.0
  %1011 = vmatprep.subr.mxu0 0.0
  %1012 = vmatpush1.msra.mxu0 0.0
  %1013 = vmatprep.subr.mxu0 0.0
  %1014 = vmatpush1.msra.mxu0 0.0
  %1015 = vmatprep.subr.mxu0 0.0
  %1016 = vmatpush1.msra.mxu0 0.0
  %1017 = vmatprep.subr.mxu0 0.0
  %1018 = vmatpush1.msra.mxu0 0.0
  %1019 = vmatprep.subr.mxu0 0.0
  %1020 = vmatpush1.msra.mxu0 0.0
  %1021 = vmatprep.subr.mxu0 0.0
  %1022 = vmatpush1.msra.mxu0 0.0
  %1023 = vmatprep.subr.mxu0 0.0
  %1024 = vmatpush1.msra.mxu0 0.0
  %1025 = vmatprep.subr.mxu0 0.0
  %1026 = vmatpush1.msra.mxu0 0.0
  %1027 = vmatprep.subr.mxu0 0.0
  %1028 = vmatpush1.msra.mxu0 0.0
  %1029 = vmatprep.subr.mxu0 0.0
  %1030 = vmatpush1.msra.mxu0 0.0
  %1031 = vmatprep.subr.mxu0 0.0
  %1032 = vmatpush1.msra.mxu0 0.0
  %1033 = vmatprep.subr.mxu0 0.0
  %1034 = vmatpush1.msra.mxu0 0.0
  %1035 = vmatprep.subr.mxu0 0.0
  %1036 = vmatpush1.msra.mxu0 0.0
  %1037 = vmatprep.subr.mxu0 0.0
  %1038 = vmatpush1.msra.mxu0 0.0
  %1039 = vmatprep.subr.mxu0 0.0
  %1040 = vmatpush1.msra.mxu0 0.0
  %1041 = vmatprep.subr.mxu0 0.0
  %1042 = vmatpush1.msra.mxu0 0.0
  %1043 = vmatprep.subr.mxu0 0.0
  %1044 = vmatpush1.msra.mxu0 0.0
  %1045 = vmatprep.subr.mxu0 0.0
  %1046 = vmatpush1.msra.mxu0 0.0
  %1047 = vmatprep.subr.mxu0 0.0
  %1048 = vmatpush1.msra.mxu0 0.0
  %1049 = vmatprep.subr.mxu0 0.0
  %1050 = vmatpush1.msra.mxu0 0.0
  %1051 = vmatprep.subr.mxu0 0.0
  %1052 = vmatpush1.msra.mxu0 0.0
  %1053 = vmatprep.subr.mxu0 0.0
  %1054 = vmatpush1.msra.mxu0 0.0
  %1055 = vmatprep.mubr.f32.mxu0 0.0
  %v1056 = vand.u32 %v297, 4294901760
  %v1057 = vsub.f32 %v297, %v1056
  %v1058 = vand.u32 %v1057, 4294901760
  %1059 = vmatmul.mubr.f32.gmra.mrb[0].mxu0 %v1058
  %v1060 = vpop.f32.mrb[0].mxu0
  %v1061 = vadd.f32 %v863, %v1060
  %v1062 = vpop.f32.mrb[0].mxu0
  %v1063 = vadd.f32 %v865, %v1062
  %1064 = vmatprep.mubr.f32.mxu0 0.0
  %v1065 = vand.u32 %v300, 4294901760
  %v1066 = vsub.f32 %v300, %v1065
  %v1067 = vand.u32 %v1066, 4294901760
  %1068 = vmatmul.mubr.f32.gmra.mrb[0].mxu0 %v1067
  %v1069 = vpop.f32.mrb[0].mxu0
  %v1070 = vadd.f32 %v871, %v1069
  %v1071 = vpop.f32.mrb[0].mxu0
  %v1072 = vadd.f32 %v873, %v1071
  %1073 = vmatprep.mubr.f32.mxu0 0.0
  %v1074 = vand.u32 %v303, 4294901760
  %v1075 = vsub.f32 %v303, %v1074
  %v1076 = vand.u32 %v1075, 4294901760
  %1077 = vmatmul.mubr.f32.gmra.mrb[0].mxu0 %v1076
  %v1078 = vpop.f32.mrb[0].mxu0
  %v1079 = vadd.f32 %v879, %v1078
  %v1080 = vpop.f32.mrb[0].mxu0
  %v1081 = vadd.f32 %v881, %v1080
  %1082 = vmatprep.mubr.f32.mxu0 0.0
  %v1083 = vand.u32 %v306, 4294901760
  %v1084 = vsub.f32 %v306, %v1083
  %v1085 = vand.u32 %v1084, 4294901760
  %1086 = vmatmul.mubr.f32.gmra.mrb[0].mxu0 %v1085
  %v1087 = vpop.f32.mrb[0].mxu0
  %v1088 = vadd.f32 %v887, %v1087
  %v1089 = vpop.f32.mrb[0].mxu0
  %v1090 = vadd.f32 %v889, %v1089
  %1091 = vmatprep.mubr.f32.mxu0 0.0
  %v1092 = vand.u32 %v309, 4294901760
  %v1093 = vsub.f32 %v309, %v1092
  %v1094 = vand.u32 %v1093, 4294901760
  %1095 = vmatmul.mubr.f32.gmra.mrb[0].mxu0 %v1094
  %v1096 = vpop.f32.mrb[0].mxu0
  %v1097 = vadd.f32 %v895, %v1096
  %v1098 = vpop.f32.mrb[0].mxu0
  %v1099 = vadd.f32 %v897, %v1098
  %1100 = vmatprep.mubr.f32.mxu0 0.0
  %v1101 = vand.u32 %v312, 4294901760
  %v1102 = vsub.f32 %v312, %v1101
  %v1103 = vand.u32 %v1102, 4294901760
  %1104 = vmatmul.mubr.f32.gmra.mrb[0].mxu0 %v1103
  %v1105 = vpop.f32.mrb[0].mxu0
  %v1106 = vadd.f32 %v903, %v1105
  %v1107 = vpop.f32.mrb[0].mxu0
  %v1108 = vadd.f32 %v905, %v1107
  %1109 = vmatprep.mubr.f32.mxu0 0.0
  %v1110 = vand.u32 %v315, 4294901760
  %v1111 = vsub.f32 %v315, %v1110
  %v1112 = vand.u32 %v1111, 4294901760
  %1113 = vmatmul.mubr.f32.gmra.mrb[0].mxu0 %v1112
  %v1114 = vpop.f32.mrb[0].mxu0
  %v1115 = vadd.f32 %v911, %v1114
  %v1116 = vpop.f32.mrb[0].mxu0
  %v1117 = vadd.f32 %v913, %v1116
  %1118 = vmatprep.mubr.f32.mxu0 0.0
  %v1119 = vand.u32 %v318, 4294901760
  %v1120 = vsub.f32 %v318, %v1119
  %v1121 = vand.u32 %v1120, 4294901760
  %1122 = vmatmul.mubr.f32.gmra.mrb[0].mxu0 %v1121
  %v1123 = vpop.f32.mrb[0].mxu0
  %v1124 = vadd.f32 %v919, %v1123
  %v1125 = vpop.f32.mrb[0].mxu0
  %v1126 = vadd.f32 %v921, %v1125
  %1127 = vmatprep.mubr.f32.mxu0 0.0
  %v1128 = vand.u32 %v321, 4294901760
  %v1129 = vsub.f32 %v321, %v1128
  %v1130 = vand.u32 %v1129, 4294901760
  %1131 = vmatmul.mubr.f32.gmra.mrb[0].mxu0 %v1130
  %v1132 = vpop.f32.mrb[0].mxu0
  %v1133 = vadd.f32 %v927, %v1132
  %v1134 = vpop.f32.mrb[0].mxu0
  %v1135 = vadd.f32 %v929, %v1134
  %1136 = vmatprep.mubr.f32.mxu0 0.0
  %v1137 = vand.u32 %v324, 4294901760
  %v1138 = vsub.f32 %v324, %v1137
  %v1139 = vand.u32 %v1138, 4294901760
  %1140 = vmatmul.mubr.f32.gmra.mrb[0].mxu0 %v1139
  %v1141 = vpop.f32.mrb[0].mxu0
  %v1142 = vadd.f32 %v935, %v1141
  %v1143 = vpop.f32.mrb[0].mxu0
  %v1144 = vadd.f32 %v937, %v1143
  %1145 = vmatprep.mubr.f32.mxu0 0.0
  %v1146 = vand.u32 %v327, 4294901760
  %v1147 = vsub.f32 %v327, %v1146
  %v1148 = vand.u32 %v1147, 4294901760
  %1149 = vmatmul.mubr.f32.gmra.mrb[0].mxu0 %v1148
  %v1150 = vpop.f32.mrb[0].mxu0
  %v1151 = vadd.f32 %v943, %v1150
  %v1152 = vpop.f32.mrb[0].mxu0
  %v1153 = vadd.f32 %v945, %v1152
  %1154 = vmatprep.mubr.f32.mxu0 0.0
  %v1155 = vand.u32 %v330, 4294901760
  %v1156 = vsub.f32 %v330, %v1155
  %v1157 = vand.u32 %v1156, 4294901760
  %1158 = vmatmul.mubr.f32.gmra.mrb[0].mxu0 %v1157
  %v1159 = vpop.f32.mrb[0].mxu0
  %v1160 = vadd.f32 %v951, %v1159
  %v1161 = vpop.f32.mrb[0].mxu0
  %v1162 = vadd.f32 %v953, %v1161
  %1163 = vmatprep.mubr.f32.mxu0 0.0
  %v1164 = vand.u32 %v333, 4294901760
  %v1165 = vsub.f32 %v333, %v1164
  %v1166 = vand.u32 %v1165, 4294901760
  %1167 = vmatmul.mubr.f32.gmra.mrb[0].mxu0 %v1166
  %v1168 = vpop.f32.mrb[0].mxu0
  %v1169 = vadd.f32 %v959, %v1168
  %v1170 = vpop.f32.mrb[0].mxu0
  %v1171 = vadd.f32 %v961, %v1170
  %1172 = vmatprep.mubr.f32.mxu0 0.0
  %v1173 = vand.u32 %v336, 4294901760
  %v1174 = vsub.f32 %v336, %v1173
  %v1175 = vand.u32 %v1174, 4294901760
  %1176 = vmatmul.mubr.f32.gmra.mrb[0].mxu0 %v1175
  %v1177 = vpop.f32.mrb[0].mxu0
  %v1178 = vadd.f32 %v967, %v1177
  %v1179 = vpop.f32.mrb[0].mxu0
  %v1180 = vadd.f32 %v969, %v1179
  %1181 = vmatprep.mubr.f32.mxu0 0.0
  %v1182 = vand.u32 %v339, 4294901760
  %v1183 = vsub.f32 %v339, %v1182
  %v1184 = vand.u32 %v1183, 4294901760
  %1185 = vmatmul.mubr.f32.gmra.mrb[0].mxu0 %v1184
  %v1186 = vpop.f32.mrb[0].mxu0
  %v1187 = vadd.f32 %v975, %v1186
  %v1188 = vpop.f32.mrb[0].mxu0
  %v1189 = vadd.f32 %v977, %v1188
  %1190 = vmatprep.mubr.f32.mxu0 0.0
  %v1191 = vand.u32 %v342, 4294901760
  %v1192 = vsub.f32 %v342, %v1191
  %v1193 = vand.u32 %v1192, 4294901760
  %1194 = vmatmul.mubr.f32.gmra.mrb[0].mxu0 %v1193
  %v1195 = vpop.f32.mrb[0].mxu0
  %v1196 = vadd.f32 %v983, %v1195
  %v1197 = vpop.f32.mrb[0].mxu0
  %v1198 = vadd.f32 %v985, %v1197
  %1199 = vdwg.mxu0
  %v1200 = vand.u32 %v293, 4294901760
  %v1201 = vsub.f32 %v293, %v1200
  %v1202 = vand.u32 %v1201, 4294901760
  %1203 = vmatprep.subr.mxu0 %v1202
  %v1204 = vand.u32 %v292, 4294901760
  %v1205 = vsub.f32 %v292, %v1204
  %v1206 = vand.u32 %v1205, 4294901760
  %1207 = vmatpush1.msra.mxu0 %v1206
  %v1208 = vand.u32 %v295, 4294901760
  %v1209 = vsub.f32 %v295, %v1208
  %v1210 = vand.u32 %v1209, 4294901760
  %1211 = vmatprep.subr.mxu0 %v1210
  %v1212 = vand.u32 %v294, 4294901760
  %v1213 = vsub.f32 %v294, %v1212
  %v1214 = vand.u32 %v1213, 4294901760
  %1215 = vmatpush1.msra.mxu0 %v1214
  %1216 = vmatprep.subr.mxu0 0.0
  %1217 = vmatpush1.msra.mxu0 0.0
  %1218 = vmatprep.subr.mxu0 0.0
  %1219 = vmatpush1.msra.mxu0 0.0
  %1220 = vmatprep.subr.mxu0 0.0
  %1221 = vmatpush1.msra.mxu0 0.0
  %1222 = vmatprep.subr.mxu0 0.0
  %1223 = vmatpush1.msra.mxu0 0.0
  %1224 = vmatprep.subr.mxu0 0.0
  %1225 = vmatpush1.msra.mxu0 0.0
  %1226 = vmatprep.subr.mxu0 0.0
  %1227 = vmatpush1.msra.mxu0 0.0
  %1228 = vmatprep.subr.mxu0 0.0
  %1229 = vmatpush1.msra.mxu0 0.0
  %1230 = vmatprep.subr.mxu0 0.0
  %1231 = vmatpush1.msra.mxu0 0.0
  %1232 = vmatprep.subr.mxu0 0.0
  %1233 = vmatpush1.msra.mxu0 0.0
  %1234 = vmatprep.subr.mxu0 0.0
  %1235 = vmatpush1.msra.mxu0 0.0
  %1236 = vmatprep.subr.mxu0 0.0
  %1237 = vmatpush1.msra.mxu0 0.0
  %1238 = vmatprep.subr.mxu0 0.0
  %1239 = vmatpush1.msra.mxu0 0.0
  %1240 = vmatprep.subr.mxu0 0.0
  %1241 = vmatpush1.msra.mxu0 0.0
  %1242 = vmatprep.subr.mxu0 0.0
  %1243 = vmatpush1.msra.mxu0 0.0
  %1244 = vmatprep.subr.mxu0 0.0
  %1245 = vmatpush1.msra.mxu0 0.0
  %1246 = vmatprep.subr.mxu0 0.0
  %1247 = vmatpush1.msra.mxu0 0.0
  %1248 = vmatprep.subr.mxu0 0.0
  %1249 = vmatpush1.msra.mxu0 0.0
  %1250 = vmatprep.subr.mxu0 0.0
  %1251 = vmatpush1.msra.mxu0 0.0
  %1252 = vmatprep.subr.mxu0 0.0
  %1253 = vmatpush1.msra.mxu0 0.0
  %1254 = vmatprep.subr.mxu0 0.0
  %1255 = vmatpush1.msra.mxu0 0.0
  %1256 = vmatprep.subr.mxu0 0.0
  %1257 = vmatpush1.msra.mxu0 0.0
  %1258 = vmatprep.subr.mxu0 0.0
  %1259 = vmatpush1.msra.mxu0 0.0
  %1260 = vmatprep.subr.mxu0 0.0
  %1261 = vmatpush1.msra.mxu0 0.0
  %1262 = vmatprep.subr.mxu0 0.0
  %1263 = vmatpush1.msra.mxu0 0.0
  %1264 = vmatprep.subr.mxu0 0.0
  %1265 = vmatpush1.msra.mxu0 0.0
  %1266 = vmatprep.subr.mxu0 0.0
  %1267 = vmatpush1.msra.mxu0 0.0
  %1268 = vmatprep.subr.mxu0 0.0
  %1269 = vmatpush1.msra.mxu0 0.0
  %1270 = vmatprep.subr.mxu0 0.0
  %1271 = vmatpush1.msra.mxu0 0.0
  %1272 = vmatprep.subr.mxu0 0.0
  %1273 = vmatpush1.msra.mxu0 0.0
  %1274 = vmatprep.subr.mxu0 0.0
  %1275 = vmatpush1.msra.mxu0 0.0
  %1276 = vmatprep.mubr.f32.mxu0 0.0
  %v1277 = vand.u32 %v297, 4294901760
  %1278 = vmatmul.mubr.f32.gmra.mrb[0].mxu0 %v1277
  %v1279 = vpop.f32.mrb[0].mxu0
  %v1280 = vadd.f32 %v1061, %v1279
  %v1281 = vpop.f32.mrb[0].mxu0
  %v1282 = vadd.f32 %v1063, %v1281
  %1283 = vmatprep.mubr.f32.mxu0 0.0
  %v1284 = vand.u32 %v300, 4294901760
  %1285 = vmatmul.mubr.f32.gmra.mrb[0].mxu0 %v1284
  %v1286 = vpop.f32.mrb[0].mxu0
  %v1287 = vadd.f32 %v1070, %v1286
  %v1288 = vpop.f32.mrb[0].mxu0
  %v1289 = vadd.f32 %v1072, %v1288
  %1290 = vmatprep.mubr.f32.mxu0 0.0
  %v1291 = vand.u32 %v303, 4294901760
  %1292 = vmatmul.mubr.f32.gmra.mrb[0].mxu0 %v1291
  %v1293 = vpop.f32.mrb[0].mxu0
  %v1294 = vadd.f32 %v1079, %v1293
  %v1295 = vpop.f32.mrb[0].mxu0
  %v1296 = vadd.f32 %v1081, %v1295
  %1297 = vmatprep.mubr.f32.mxu0 0.0
  %v1298 = vand.u32 %v306, 4294901760
  %1299 = vmatmul.mubr.f32.gmra.mrb[0].mxu0 %v1298
  %v1300 = vpop.f32.mrb[0].mxu0
  %v1301 = vadd.f32 %v1088, %v1300
  %v1302 = vpop.f32.mrb[0].mxu0
  %v1303 = vadd.f32 %v1090, %v1302
  %1304 = vmatprep.mubr.f32.mxu0 0.0
  %v1305 = vand.u32 %v309, 4294901760
  %1306 = vmatmul.mubr.f32.gmra.mrb[0].mxu0 %v1305
  %v1307 = vpop.f32.mrb[0].mxu0
  %v1308 = vadd.f32 %v1097, %v1307
  %v1309 = vpop.f32.mrb[0].mxu0
  %v1310 = vadd.f32 %v1099, %v1309
  %1311 = vmatprep.mubr.f32.mxu0 0.0
  %v1312 = vand.u32 %v312, 4294901760
  %1313 = vmatmul.mubr.f32.gmra.mrb[0].mxu0 %v1312
  %v1314 = vpop.f32.mrb[0].mxu0
  %v1315 = vadd.f32 %v1106, %v1314
  %v1316 = vpop.f32.mrb[0].mxu0
  %v1317 = vadd.f32 %v1108, %v1316
  %1318 = vmatprep.mubr.f32.mxu0 0.0
  %v1319 = vand.u32 %v315, 4294901760
  %1320 = vmatmul.mubr.f32.gmra.mrb[0].mxu0 %v1319
  %v1321 = vpop.f32.mrb[0].mxu0
  %v1322 = vadd.f32 %v1115, %v1321
  %v1323 = vpop.f32.mrb[0].mxu0
  %v1324 = vadd.f32 %v1117, %v1323
  %1325 = vmatprep.mubr.f32.mxu0 0.0
  %v1326 = vand.u32 %v318, 4294901760
  %1327 = vmatmul.mubr.f32.gmra.mrb[0].mxu0 %v1326
  %v1328 = vpop.f32.mrb[0].mxu0
  %v1329 = vadd.f32 %v1124, %v1328
  %v1330 = vpop.f32.mrb[0].mxu0
  %v1331 = vadd.f32 %v1126, %v1330
  %1332 = vmatprep.mubr.f32.mxu0 0.0
  %v1333 = vand.u32 %v321, 4294901760
  %1334 = vmatmul.mubr.f32.gmra.mrb[0].mxu0 %v1333
  %v1335 = vpop.f32.mrb[0].mxu0
  %v1336 = vadd.f32 %v1133, %v1335
  %v1337 = vpop.f32.mrb[0].mxu0
  %v1338 = vadd.f32 %v1135, %v1337
  %1339 = vmatprep.mubr.f32.mxu0 0.0
  %v1340 = vand.u32 %v324, 4294901760
  %1341 = vmatmul.mubr.f32.gmra.mrb[0].mxu0 %v1340
  %v1342 = vpop.f32.mrb[0].mxu0
  %v1343 = vadd.f32 %v1142, %v1342
  %v1344 = vpop.f32.mrb[0].mxu0
  %v1345 = vadd.f32 %v1144, %v1344
  %1346 = vmatprep.mubr.f32.mxu0 0.0
  %v1347 = vand.u32 %v327, 4294901760
  %1348 = vmatmul.mubr.f32.gmra.mrb[0].mxu0 %v1347
  %v1349 = vpop.f32.mrb[0].mxu0
  %v1350 = vadd.f32 %v1151, %v1349
  %v1351 = vpop.f32.mrb[0].mxu0
  %v1352 = vadd.f32 %v1153, %v1351
  %1353 = vmatprep.mubr.f32.mxu0 0.0
  %v1354 = vand.u32 %v330, 4294901760
  %1355 = vmatmul.mubr.f32.gmra.mrb[0].mxu0 %v1354
  %v1356 = vpop.f32.mrb[0].mxu0
  %v1357 = vadd.f32 %v1160, %v1356
  %v1358 = vpop.f32.mrb[0].mxu0
  %v1359 = vadd.f32 %v1162, %v1358
  %1360 = vmatprep.mubr.f32.mxu0 0.0
  %v1361 = vand.u32 %v333, 4294901760
  %1362 = vmatmul.mubr.f32.gmra.mrb[0].mxu0 %v1361
  %v1363 = vpop.f32.mrb[0].mxu0
  %v1364 = vadd.f32 %v1169, %v1363
  %v1365 = vpop.f32.mrb[0].mxu0
  %v1366 = vadd.f32 %v1171, %v1365
  %1367 = vmatprep.mubr.f32.mxu0 0.0
  %v1368 = vand.u32 %v336, 4294901760
  %1369 = vmatmul.mubr.f32.gmra.mrb[0].mxu0 %v1368
  %v1370 = vpop.f32.mrb[0].mxu0
  %v1371 = vadd.f32 %v1178, %v1370
  %v1372 = vpop.f32.mrb[0].mxu0
  %v1373 = vadd.f32 %v1180, %v1372
  %1374 = vmatprep.mubr.f32.mxu0 0.0
  %v1375 = vand.u32 %v339, 4294901760
  %1376 = vmatmul.mubr.f32.gmra.mrb[0].mxu0 %v1375
  %v1377 = vpop.f32.mrb[0].mxu0
  %v1378 = vadd.f32 %v1187, %v1377
  %v1379 = vpop.f32.mrb[0].mxu0
  %v1380 = vadd.f32 %v1189, %v1379
  %1381 = vmatprep.mubr.f32.mxu0 0.0
  %v1382 = vand.u32 %v342, 4294901760
  %1383 = vmatmul.mubr.f32.gmra.mrb[0].mxu0 %v1382
  %v1384 = vpop.f32.mrb[0].mxu0
  %v1385 = vadd.f32 %v1196, %v1384
  %v1386 = vpop.f32.mrb[0].mxu0
  %v1387 = vadd.f32 %v1198, %v1386
  %1388 = vdwg.mxu0
  %v1389 = vand.u32 %v293, 4294901760
  %1390 = vmatprep.subr.mxu0 %v1389
  %v1391 = vand.u32 %v292, 4294901760
  %1392 = vmatpush1.msra.mxu0 %v1391
  %v1393 = vand.u32 %v295, 4294901760
  %1394 = vmatprep.subr.mxu0 %v1393
  %v1395 = vand.u32 %v294, 4294901760
  %1396 = vmatpush1.msra.mxu0 %v1395
  %1397 = vmatprep.subr.mxu0 0.0
  %1398 = vmatpush1.msra.mxu0 0.0
  %1399 = vmatprep.subr.mxu0 0.0
  %1400 = vmatpush1.msra.mxu0 0.0
  %1401 = vmatprep.subr.mxu0 0.0
  %1402 = vmatpush1.msra.mxu0 0.0
  %1403 = vmatprep.subr.mxu0 0.0
  %1404 = vmatpush1.msra.mxu0 0.0
  %1405 = vmatprep.subr.mxu0 0.0
  %1406 = vmatpush1.msra.mxu0 0.0
  %1407 = vmatprep.subr.mxu0 0.0
  %1408 = vmatpush1.msra.mxu0 0.0
  %1409 = vmatprep.subr.mxu0 0.0
  %1410 = vmatpush1.msra.mxu0 0.0
  %1411 = vmatprep.subr.mxu0 0.0
  %1412 = vmatpush1.msra.mxu0 0.0
  %1413 = vmatprep.subr.mxu0 0.0
  %1414 = vmatpush1.msra.mxu0 0.0
  %1415 = vmatprep.subr.mxu0 0.0
  %1416 = vmatpush1.msra.mxu0 0.0
  %1417 = vmatprep.subr.mxu0 0.0
  %1418 = vmatpush1.msra.mxu0 0.0
  %1419 = vmatprep.subr.mxu0 0.0
  %1420 = vmatpush1.msra.mxu0 0.0
  %1421 = vmatprep.subr.mxu0 0.0
  %1422 = vmatpush1.msra.mxu0 0.0
  %1423 = vmatprep.subr.mxu0 0.0
  %1424 = vmatpush1.msra.mxu0 0.0
  %1425 = vmatprep.subr.mxu0 0.0
  %1426 = vmatpush1.msra.mxu0 0.0
  %1427 = vmatprep.subr.mxu0 0.0
  %1428 = vmatpush1.msra.mxu0 0.0
  %1429 = vmatprep.subr.mxu0 0.0
  %1430 = vmatpush1.msra.mxu0 0.0
  %1431 = vmatprep.subr.mxu0 0.0
  %1432 = vmatpush1.msra.mxu0 0.0
  %1433 = vmatprep.subr.mxu0 0.0
  %1434 = vmatpush1.msra.mxu0 0.0
  %1435 = vmatprep.subr.mxu0 0.0
  %1436 = vmatpush1.msra.mxu0 0.0
  %1437 = vmatprep.subr.mxu0 0.0
  %1438 = vmatpush1.msra.mxu0 0.0
  %1439 = vmatprep.subr.mxu0 0.0
  %1440 = vmatpush1.msra.mxu0 0.0
  %1441 = vmatprep.subr.mxu0 0.0
  %1442 = vmatpush1.msra.mxu0 0.0
  %1443 = vmatprep.subr.mxu0 0.0
  %1444 = vmatpush1.msra.mxu0 0.0
  %1445 = vmatprep.subr.mxu0 0.0
  %1446 = vmatpush1.msra.mxu0 0.0
  %1447 = vmatprep.subr.mxu0 0.0
  %1448 = vmatpush1.msra.mxu0 0.0
  %1449 = vmatprep.subr.mxu0 0.0
  %1450 = vmatpush1.msra.mxu0 0.0
  %1451 = vmatprep.subr.mxu0 0.0
  %1452 = vmatpush1.msra.mxu0 0.0
  %1453 = vmatprep.subr.mxu0 0.0
  %1454 = vmatpush1.msra.mxu0 0.0
  %1455 = vmatprep.subr.mxu0 0.0
  %1456 = vmatpush1.msra.mxu0 0.0
  %1457 = vmatprep.mubr.f32.mxu0 0.0
  %v1458 = vand.u32 %v297, 4294901760
  %1459 = vmatmul.mubr.f32.gmra.mrb[0].mxu0 %v1458
  %v1460 = vpop.f32.mrb[0].mxu0
  %v1461 = vadd.f32 %v1280, %v1460
  %v1462 = vpop.f32.mrb[0].mxu0
  %v1463 = vadd.f32 %v1282, %v1462
  %1464 = vmatprep.mubr.f32.mxu0 0.0
  %v1465 = vand.u32 %v300, 4294901760
  %1466 = vmatmul.mubr.f32.gmra.mrb[0].mxu0 %v1465
  %v1467 = vpop.f32.mrb[0].mxu0
  %v1468 = vadd.f32 %v1287, %v1467
  %v1469 = vpop.f32.mrb[0].mxu0
  %v1470 = vadd.f32 %v1289, %v1469
  %1471 = vmatprep.mubr.f32.mxu0 0.0
  %v1472 = vand.u32 %v303, 4294901760
  %1473 = vmatmul.mubr.f32.gmra.mrb[0].mxu0 %v1472
  %v1474 = vpop.f32.mrb[0].mxu0
  %v1475 = vadd.f32 %v1294, %v1474
  %v1476 = vpop.f32.mrb[0].mxu0
  %v1477 = vadd.f32 %v1296, %v1476
  %1478 = vmatprep.mubr.f32.mxu0 0.0
  %v1479 = vand.u32 %v306, 4294901760
  %1480 = vmatmul.mubr.f32.gmra.mrb[0].mxu0 %v1479
  %v1481 = vpop.f32.mrb[0].mxu0
  %v1482 = vadd.f32 %v1301, %v1481
  %v1483 = vpop.f32.mrb[0].mxu0
  %v1484 = vadd.f32 %v1303, %v1483
  %1485 = vmatprep.mubr.f32.mxu0 0.0
  %v1486 = vand.u32 %v309, 4294901760
  %1487 = vmatmul.mubr.f32.gmra.mrb[0].mxu0 %v1486
  %v1488 = vpop.f32.mrb[0].mxu0
  %v1489 = vadd.f32 %v1308, %v1488
  %v1490 = vpop.f32.mrb[0].mxu0
  %v1491 = vadd.f32 %v1310, %v1490
  %1492 = vmatprep.mubr.f32.mxu0 0.0
  %v1493 = vand.u32 %v312, 4294901760
  %1494 = vmatmul.mubr.f32.gmra.mrb[0].mxu0 %v1493
  %v1495 = vpop.f32.mrb[0].mxu0
  %v1496 = vadd.f32 %v1315, %v1495
  %v1497 = vpop.f32.mrb[0].mxu0
  %v1498 = vadd.f32 %v1317, %v1497
  %1499 = vmatprep.mubr.f32.mxu0 0.0
  %v1500 = vand.u32 %v315, 4294901760
  %1501 = vmatmul.mubr.f32.gmra.mrb[0].mxu0 %v1500
  %v1502 = vpop.f32.mrb[0].mxu0
  %v1503 = vadd.f32 %v1322, %v1502
  %v1504 = vpop.f32.mrb[0].mxu0
  %v1505 = vadd.f32 %v1324, %v1504
  %1506 = vmatprep.mubr.f32.mxu0 0.0
  %v1507 = vand.u32 %v318, 4294901760
  %1508 = vmatmul.mubr.f32.gmra.mrb[0].mxu0 %v1507
  %v1509 = vpop.f32.mrb[0].mxu0
  %v1510 = vadd.f32 %v1329, %v1509
  %v1511 = vpop.f32.mrb[0].mxu0
  %v1512 = vadd.f32 %v1331, %v1511
  %1513 = vmatprep.mubr.f32.mxu0 0.0
  %v1514 = vand.u32 %v321, 4294901760
  %1515 = vmatmul.mubr.f32.gmra.mrb[0].mxu0 %v1514
  %v1516 = vpop.f32.mrb[0].mxu0
  %v1517 = vadd.f32 %v1336, %v1516
  %v1518 = vpop.f32.mrb[0].mxu0
  %v1519 = vadd.f32 %v1338, %v1518
  %1520 = vmatprep.mubr.f32.mxu0 0.0
  %v1521 = vand.u32 %v324, 4294901760
  %1522 = vmatmul.mubr.f32.gmra.mrb[0].mxu0 %v1521
  %v1523 = vpop.f32.mrb[0].mxu0
  %v1524 = vadd.f32 %v1343, %v1523
  %v1525 = vpop.f32.mrb[0].mxu0
  %v1526 = vadd.f32 %v1345, %v1525
  %1527 = vmatprep.mubr.f32.mxu0 0.0
  %v1528 = vand.u32 %v327, 4294901760
  %1529 = vmatmul.mubr.f32.gmra.mrb[0].mxu0 %v1528
  %v1530 = vpop.f32.mrb[0].mxu0
  %v1531 = vadd.f32 %v1350, %v1530
  %v1532 = vpop.f32.mrb[0].mxu0
  %v1533 = vadd.f32 %v1352, %v1532
  %1534 = vmatprep.mubr.f32.mxu0 0.0
  %v1535 = vand.u32 %v330, 4294901760
  %1536 = vmatmul.mubr.f32.gmra.mrb[0].mxu0 %v1535
  %v1537 = vpop.f32.mrb[0].mxu0
  %v1538 = vadd.f32 %v1357, %v1537
  %v1539 = vpop.f32.mrb[0].mxu0
  %v1540 = vadd.f32 %v1359, %v1539
  %1541 = vmatprep.mubr.f32.mxu0 0.0
  %v1542 = vand.u32 %v333, 4294901760
  %1543 = vmatmul.mubr.f32.gmra.mrb[0].mxu0 %v1542
  %v1544 = vpop.f32.mrb[0].mxu0
  %v1545 = vadd.f32 %v1364, %v1544
  %v1546 = vpop.f32.mrb[0].mxu0
  %v1547 = vadd.f32 %v1366, %v1546
  %1548 = vmatprep.mubr.f32.mxu0 0.0
  %v1549 = vand.u32 %v336, 4294901760
  %1550 = vmatmul.mubr.f32.gmra.mrb[0].mxu0 %v1549
  %v1551 = vpop.f32.mrb[0].mxu0
  %v1552 = vadd.f32 %v1371, %v1551
  %v1553 = vpop.f32.mrb[0].mxu0
  %v1554 = vadd.f32 %v1373, %v1553
  %1555 = vmatprep.mubr.f32.mxu0 0.0
  %v1556 = vand.u32 %v339, 4294901760
  %1557 = vmatmul.mubr.f32.gmra.mrb[0].mxu0 %v1556
  %v1558 = vpop.f32.mrb[0].mxu0
  %v1559 = vadd.f32 %v1378, %v1558
  %v1560 = vpop.f32.mrb[0].mxu0
  %v1561 = vadd.f32 %v1380, %v1560
  %1562 = vmatprep.mubr.f32.mxu0 0.0
  %v1563 = vand.u32 %v342, 4294901760
  %1564 = vmatmul.mubr.f32.gmra.mrb[0].mxu0 %v1563
  %v1565 = vpop.f32.mrb[0].mxu0
  %v1566 = vadd.f32 %v1385, %v1565
  %v1567 = vpop.f32.mrb[0].mxu0
  %v1568 = vadd.f32 %v1387, %v1567
  %1569 = vdwg.mxu0
  %v1570 = vld [vmem:[%s4] sm:$0xff]
  %v1571 = vld [vmem:[%s4 + $0x8] sm:$0xff]
  %v1572 = vld [vmem:[%s4 + $0x10] sm:$0xff]
  %v1573 = vld [vmem:[%s4 + $0x18] sm:$0xff]
  %v1574 = vand.u32 %v1571, 4294901760
  %1575 = vmatprep.subr.mxu0 %v1574
  %v1576 = vand.u32 %v1570, 4294901760
  %1577 = vmatpush1.msra.mxu0 %v1576
  %v1578 = vand.u32 %v1573, 4294901760
  %1579 = vmatprep.subr.mxu0 %v1578
  %v1580 = vand.u32 %v1572, 4294901760
  %1581 = vmatpush1.msra.mxu0 %v1580
  %1582 = vmatprep.subr.mxu0 0.0
  %1583 = vmatpush1.msra.mxu0 0.0
  %1584 = vmatprep.subr.mxu0 0.0
  %1585 = vmatpush1.msra.mxu0 0.0
  %1586 = vmatprep.subr.mxu0 0.0
  %1587 = vmatpush1.msra.mxu0 0.0
  %1588 = vmatprep.subr.mxu0 0.0
  %1589 = vmatpush1.msra.mxu0 0.0
  %1590 = vmatprep.subr.mxu0 0.0
  %1591 = vmatpush1.msra.mxu0 0.0
  %1592 = vmatprep.subr.mxu0 0.0
  %1593 = vmatpush1.msra.mxu0 0.0
  %1594 = vmatprep.subr.mxu0 0.0
  %1595 = vmatpush1.msra.mxu0 0.0
  %1596 = vmatprep.subr.mxu0 0.0
  %1597 = vmatpush1.msra.mxu0 0.0
  %1598 = vmatprep.subr.mxu0 0.0
  %1599 = vmatpush1.msra.mxu0 0.0
  %1600 = vmatprep.subr.mxu0 0.0
  %1601 = vmatpush1.msra.mxu0 0.0
  %1602 = vmatprep.subr.mxu0 0.0
  %1603 = vmatpush1.msra.mxu0 0.0
  %1604 = vmatprep.subr.mxu0 0.0
  %1605 = vmatpush1.msra.mxu0 0.0
  %1606 = vmatprep.subr.mxu0 0.0
  %1607 = vmatpush1.msra.mxu0 0.0
  %1608 = vmatprep.subr.mxu0 0.0
  %1609 = vmatpush1.msra.mxu0 0.0
  %1610 = vmatprep.subr.mxu0 0.0
  %1611 = vmatpush1.msra.mxu0 0.0
  %1612 = vmatprep.subr.mxu0 0.0
  %1613 = vmatpush1.msra.mxu0 0.0
  %1614 = vmatprep.subr.mxu0 0.0
  %1615 = vmatpush1.msra.mxu0 0.0
  %1616 = vmatprep.subr.mxu0 0.0
  %1617 = vmatpush1.msra.mxu0 0.0
  %1618 = vmatprep.subr.mxu0 0.0
  %1619 = vmatpush1.msra.mxu0 0.0
  %1620 = vmatprep.subr.mxu0 0.0
  %1621 = vmatpush1.msra.mxu0 0.0
  %1622 = vmatprep.subr.mxu0 0.0
  %1623 = vmatpush1.msra.mxu0 0.0
  %1624 = vmatprep.subr.mxu0 0.0
  %1625 = vmatpush1.msra.mxu0 0.0
  %1626 = vmatprep.subr.mxu0 0.0
  %1627 = vmatpush1.msra.mxu0 0.0
  %1628 = vmatprep.subr.mxu0 0.0
  %1629 = vmatpush1.msra.mxu0 0.0
  %1630 = vmatprep.subr.mxu0 0.0
  %1631 = vmatpush1.msra.mxu0 0.0
  %1632 = vmatprep.subr.mxu0 0.0
  %1633 = vmatpush1.msra.mxu0 0.0
  %1634 = vmatprep.subr.mxu0 0.0
  %1635 = vmatpush1.msra.mxu0 0.0
  %1636 = vmatprep.subr.mxu0 0.0
  %1637 = vmatpush1.msra.mxu0 0.0
  %1638 = vmatprep.subr.mxu0 0.0
  %1639 = vmatpush1.msra.mxu0 0.0
  %1640 = vmatprep.subr.mxu0 0.0
  %1641 = vmatpush1.msra.mxu0 0.0
  %1642 = vmatprep.mubr.f32.mxu0 0.0
  %v1643 = vand.u32 %v297, 4294901760
  %v1644 = vsub.f32 %v297, %v1643
  %v1645 = vand.u32 %v1644, 4294901760
  %v1646 = vsub.f32 %v1644, %v1645
  %v1647 = vand.u32 %v1646, 4294901760
  %1648 = vmatmul.mubr.f32.gmra.mrb[0].mxu0 %v1647
  %v1649 = vpop.f32.mrb[0].mxu0
  %v1650 = vadd.f32 0.0, %v1649
  %v1651 = vpop.f32.mrb[0].mxu0
  %v1652 = vadd.f32 0.0, %v1651
  %1653 = vmatprep.mubr.f32.mxu0 0.0
  %v1654 = vand.u32 %v300, 4294901760
  %v1655 = vsub.f32 %v300, %v1654
  %v1656 = vand.u32 %v1655, 4294901760
  %v1657 = vsub.f32 %v1655, %v1656
  %v1658 = vand.u32 %v1657, 4294901760
  %1659 = vmatmul.mubr.f32.gmra.mrb[0].mxu0 %v1658
  %v1660 = vpop.f32.mrb[0].mxu0
  %v1661 = vadd.f32 0.0, %v1660
  %v1662 = vpop.f32.mrb[0].mxu0
  %v1663 = vadd.f32 0.0, %v1662
  %1664 = vmatprep.mubr.f32.mxu0 0.0
  %v1665 = vand.u32 %v303, 4294901760
  %v1666 = vsub.f32 %v303, %v1665
  %v1667 = vand.u32 %v1666, 4294901760
  %v1668 = vsub.f32 %v1666, %v1667
  %v1669 = vand.u32 %v1668, 4294901760
  %1670 = vmatmul.mubr.f32.gmra.mrb[0].mxu0 %v1669
  %v1671 = vpop.f32.mrb[0].mxu0
  %v1672 = vadd.f32 0.0, %v1671
  %v1673 = vpop.f32.mrb[0].mxu0
  %v1674 = vadd.f32 0.0, %v1673
  %1675 = vmatprep.mubr.f32.mxu0 0.0
  %v1676 = vand.u32 %v306, 4294901760
  %v1677 = vsub.f32 %v306, %v1676
  %v1678 = vand.u32 %v1677, 4294901760
  %v1679 = vsub.f32 %v1677, %v1678
  %v1680 = vand.u32 %v1679, 4294901760
  %1681 = vmatmul.mubr.f32.gmra.mrb[0].mxu0 %v1680
  %v1682 = vpop.f32.mrb[0].mxu0
  %v1683 = vadd.f32 0.0, %v1682
  %v1684 = vpop.f32.mrb[0].mxu0
  %v1685 = vadd.f32 0.0, %v1684
  %1686 = vmatprep.mubr.f32.mxu0 0.0
  %v1687 = vand.u32 %v309, 4294901760
  %v1688 = vsub.f32 %v309, %v1687
  %v1689 = vand.u32 %v1688, 4294901760
  %v1690 = vsub.f32 %v1688, %v1689
  %v1691 = vand.u32 %v1690, 4294901760
  %1692 = vmatmul.mubr.f32.gmra.mrb[0].mxu0 %v1691
  %v1693 = vpop.f32.mrb[0].mxu0
  %v1694 = vadd.f32 0.0, %v1693
  %v1695 = vpop.f32.mrb[0].mxu0
  %v1696 = vadd.f32 0.0, %v1695
  %1697 = vmatprep.mubr.f32.mxu0 0.0
  %v1698 = vand.u32 %v312, 4294901760
  %v1699 = vsub.f32 %v312, %v1698
  %v1700 = vand.u32 %v1699, 4294901760
  %v1701 = vsub.f32 %v1699, %v1700
  %v1702 = vand.u32 %v1701, 4294901760
  %1703 = vmatmul.mubr.f32.gmra.mrb[0].mxu0 %v1702
  %v1704 = vpop.f32.mrb[0].mxu0
  %v1705 = vadd.f32 0.0, %v1704
  %v1706 = vpop.f32.mrb[0].mxu0
  %v1707 = vadd.f32 0.0, %v1706
  %1708 = vmatprep.mubr.f32.mxu0 0.0
  %v1709 = vand.u32 %v315, 4294901760
  %v1710 = vsub.f32 %v315, %v1709
  %v1711 = vand.u32 %v1710, 4294901760
  %v1712 = vsub.f32 %v1710, %v1711
  %v1713 = vand.u32 %v1712, 4294901760
  %1714 = vmatmul.mubr.f32.gmra.mrb[0].mxu0 %v1713
  %v1715 = vpop.f32.mrb[0].mxu0
  %v1716 = vadd.f32 0.0, %v1715
  %v1717 = vpop.f32.mrb[0].mxu0
  %v1718 = vadd.f32 0.0, %v1717
  %1719 = vmatprep.mubr.f32.mxu0 0.0
  %v1720 = vand.u32 %v318, 4294901760
  %v1721 = vsub.f32 %v318, %v1720
  %v1722 = vand.u32 %v1721, 4294901760
  %v1723 = vsub.f32 %v1721, %v1722
  %v1724 = vand.u32 %v1723, 4294901760
  %1725 = vmatmul.mubr.f32.gmra.mrb[0].mxu0 %v1724
  %v1726 = vpop.f32.mrb[0].mxu0
  %v1727 = vadd.f32 0.0, %v1726
  %v1728 = vpop.f32.mrb[0].mxu0
  %v1729 = vadd.f32 0.0, %v1728
  %1730 = vmatprep.mubr.f32.mxu0 0.0
  %v1731 = vand.u32 %v321, 4294901760
  %v1732 = vsub.f32 %v321, %v1731
  %v1733 = vand.u32 %v1732, 4294901760
  %v1734 = vsub.f32 %v1732, %v1733
  %v1735 = vand.u32 %v1734, 4294901760
  %1736 = vmatmul.mubr.f32.gmra.mrb[0].mxu0 %v1735
  %v1737 = vpop.f32.mrb[0].mxu0
  %v1738 = vadd.f32 0.0, %v1737
  %v1739 = vpop.f32.mrb[0].mxu0
  %v1740 = vadd.f32 0.0, %v1739
  %1741 = vmatprep.mubr.f32.mxu0 0.0
  %v1742 = vand.u32 %v324, 4294901760
  %v1743 = vsub.f32 %v324, %v1742
  %v1744 = vand.u32 %v1743, 4294901760
  %v1745 = vsub.f32 %v1743, %v1744
  %v1746 = vand.u32 %v1745, 4294901760
  %1747 = vmatmul.mubr.f32.gmra.mrb[0].mxu0 %v1746
  %v1748 = vpop.f32.mrb[0].mxu0
  %v1749 = vadd.f32 0.0, %v1748
  %v1750 = vpop.f32.mrb[0].mxu0
  %v1751 = vadd.f32 0.0, %v1750
  %1752 = vmatprep.mubr.f32.mxu0 0.0
  %v1753 = vand.u32 %v327, 4294901760
  %v1754 = vsub.f32 %v327, %v1753
  %v1755 = vand.u32 %v1754, 4294901760
  %v1756 = vsub.f32 %v1754, %v1755
  %v1757 = vand.u32 %v1756, 4294901760
  %1758 = vmatmul.mubr.f32.gmra.mrb[0].mxu0 %v1757
  %v1759 = vpop.f32.mrb[0].mxu0
  %v1760 = vadd.f32 0.0, %v1759
  %v1761 = vpop.f32.mrb[0].mxu0
  %v1762 = vadd.f32 0.0, %v1761
  %1763 = vmatprep.mubr.f32.mxu0 0.0
  %v1764 = vand.u32 %v330, 4294901760
  %v1765 = vsub.f32 %v330, %v1764
  %v1766 = vand.u32 %v1765, 4294901760
  %v1767 = vsub.f32 %v1765, %v1766
  %v1768 = vand.u32 %v1767, 4294901760
  %1769 = vmatmul.mubr.f32.gmra.mrb[0].mxu0 %v1768
  %v1770 = vpop.f32.mrb[0].mxu0
  %v1771 = vadd.f32 0.0, %v1770
  %v1772 = vpop.f32.mrb[0].mxu0
  %v1773 = vadd.f32 0.0, %v1772
  %1774 = vmatprep.mubr.f32.mxu0 0.0
  %v1775 = vand.u32 %v333, 4294901760
  %v1776 = vsub.f32 %v333, %v1775
  %v1777 = vand.u32 %v1776, 4294901760
  %v1778 = vsub.f32 %v1776, %v1777
  %v1779 = vand.u32 %v1778, 4294901760
  %1780 = vmatmul.mubr.f32.gmra.mrb[0].mxu0 %v1779
  %v1781 = vpop.f32.mrb[0].mxu0
  %v1782 = vadd.f32 0.0, %v1781
  %v1783 = vpop.f32.mrb[0].mxu0
  %v1784 = vadd.f32 0.0, %v1783
  %1785 = vmatprep.mubr.f32.mxu0 0.0
  %v1786 = vand.u32 %v336, 4294901760
  %v1787 = vsub.f32 %v336, %v1786
  %v1788 = vand.u32 %v1787, 4294901760
  %v1789 = vsub.f32 %v1787, %v1788
  %v1790 = vand.u32 %v1789, 4294901760
  %1791 = vmatmul.mubr.f32.gmra.mrb[0].mxu0 %v1790
  %v1792 = vpop.f32.mrb[0].mxu0
  %v1793 = vadd.f32 0.0, %v1792
  %v1794 = vpop.f32.mrb[0].mxu0
  %v1795 = vadd.f32 0.0, %v1794
  %1796 = vmatprep.mubr.f32.mxu0 0.0
  %v1797 = vand.u32 %v339, 4294901760
  %v1798 = vsub.f32 %v339, %v1797
  %v1799 = vand.u32 %v1798, 4294901760
  %v1800 = vsub.f32 %v1798, %v1799
  %v1801 = vand.u32 %v1800, 4294901760
  %1802 = vmatmul.mubr.f32.gmra.mrb[0].mxu0 %v1801
  %v1803 = vpop.f32.mrb[0].mxu0
  %v1804 = vadd.f32 0.0, %v1803
  %v1805 = vpop.f32.mrb[0].mxu0
  %v1806 = vadd.f32 0.0, %v1805
  %1807 = vmatprep.mubr.f32.mxu0 0.0
  %v1808 = vand.u32 %v342, 4294901760
  %v1809 = vsub.f32 %v342, %v1808
  %v1810 = vand.u32 %v1809, 4294901760
  %v1811 = vsub.f32 %v1809, %v1810
  %v1812 = vand.u32 %v1811, 4294901760
  %1813 = vmatmul.mubr.f32.gmra.mrb[0].mxu0 %v1812
  %v1814 = vpop.f32.mrb[0].mxu0
  %v1815 = vadd.f32 0.0, %v1814
  %v1816 = vpop.f32.mrb[0].mxu0
  %v1817 = vadd.f32 0.0, %v1816
  %1818 = vdwg.mxu0
  %v1819 = vand.u32 %v1571, 4294901760
  %v1820 = vsub.f32 %v1571, %v1819
  %v1821 = vand.u32 %v1820, 4294901760
  %v1822 = vsub.f32 %v1820, %v1821
  %v1823 = vand.u32 %v1822, 4294901760
  %1824 = vmatprep.subr.mxu0 %v1823
  %v1825 = vand.u32 %v1570, 4294901760
  %v1826 = vsub.f32 %v1570, %v1825
  %v1827 = vand.u32 %v1826, 4294901760
  %v1828 = vsub.f32 %v1826, %v1827
  %v1829 = vand.u32 %v1828, 4294901760
  %1830 = vmatpush1.msra.mxu0 %v1829
  %v1831 = vand.u32 %v1573, 4294901760
  %v1832 = vsub.f32 %v1573, %v1831
  %v1833 = vand.u32 %v1832, 4294901760
  %v1834 = vsub.f32 %v1832, %v1833
  %v1835 = vand.u32 %v1834, 4294901760
  %1836 = vmatprep.subr.mxu0 %v1835
  %v1837 = vand.u32 %v1572, 4294901760
  %v1838 = vsub.f32 %v1572, %v1837
  %v1839 = vand.u32 %v1838, 4294901760
  %v1840 = vsub.f32 %v1838, %v1839
  %v1841 = vand.u32 %v1840, 4294901760
  %1842 = vmatpush1.msra.mxu0 %v1841
  %1843 = vmatprep.subr.mxu0 0.0
  %1844 = vmatpush1.msra.mxu0 0.0
  %1845 = vmatprep.subr.mxu0 0.0
  %1846 = vmatpush1.msra.mxu0 0.0
  %1847 = vmatprep.subr.mxu0 0.0
  %1848 = vmatpush1.msra.mxu0 0.0
  %1849 = vmatprep.subr.mxu0 0.0
  %1850 = vmatpush1.msra.mxu0 0.0
  %1851 = vmatprep.subr.mxu0 0.0
  %1852 = vmatpush1.msra.mxu0 0.0
  %1853 = vmatprep.subr.mxu0 0.0
  %1854 = vmatpush1.msra.mxu0 0.0
  %1855 = vmatprep.subr.mxu0 0.0
  %1856 = vmatpush1.msra.mxu0 0.0
  %1857 = vmatprep.subr.mxu0 0.0
  %1858 = vmatpush1.msra.mxu0 0.0
  %1859 = vmatprep.subr.mxu0 0.0
  %1860 = vmatpush1.msra.mxu0 0.0
  %1861 = vmatprep.subr.mxu0 0.0
  %1862 = vmatpush1.msra.mxu0 0.0
  %1863 = vmatprep.subr.mxu0 0.0
  %1864 = vmatpush1.msra.mxu0 0.0
  %1865 = vmatprep.subr.mxu0 0.0
  %1866 = vmatpush1.msra.mxu0 0.0
  %1867 = vmatprep.subr.mxu0 0.0
  %1868 = vmatpush1.msra.mxu0 0.0
  %1869 = vmatprep.subr.mxu0 0.0
  %1870 = vmatpush1.msra.mxu0 0.0
  %1871 = vmatprep.subr.mxu0 0.0
  %1872 = vmatpush1.msra.mxu0 0.0
  %1873 = vmatprep.subr.mxu0 0.0
  %1874 = vmatpush1.msra.mxu0 0.0
  %1875 = vmatprep.subr.mxu0 0.0
  %1876 = vmatpush1.msra.mxu0 0.0
  %1877 = vmatprep.subr.mxu0 0.0
  %1878 = vmatpush1.msra.mxu0 0.0
  %1879 = vmatprep.subr.mxu0 0.0
  %1880 = vmatpush1.msra.mxu0 0.0
  %1881 = vmatprep.subr.mxu0 0.0
  %1882 = vmatpush1.msra.mxu0 0.0
  %1883 = vmatprep.subr.mxu0 0.0
  %1884 = vmatpush1.msra.mxu0 0.0
  %1885 = vmatprep.subr.mxu0 0.0
  %1886 = vmatpush1.msra.mxu0 0.0
  %1887 = vmatprep.subr.mxu0 0.0
  %1888 = vmatpush1.msra.mxu0 0.0
  %1889 = vmatprep.subr.mxu0 0.0
  %1890 = vmatpush1.msra.mxu0 0.0
  %1891 = vmatprep.subr.mxu0 0.0
  %1892 = vmatpush1.msra.mxu0 0.0
  %1893 = vmatprep.subr.mxu0 0.0
  %1894 = vmatpush1.msra.mxu0 0.0
  %1895 = vmatprep.subr.mxu0 0.0
  %1896 = vmatpush1.msra.mxu0 0.0
  %1897 = vmatprep.subr.mxu0 0.0
  %1898 = vmatpush1.msra.mxu0 0.0
  %1899 = vmatprep.subr.mxu0 0.0
  %1900 = vmatpush1.msra.mxu0 0.0
  %1901 = vmatprep.subr.mxu0 0.0
  %1902 = vmatpush1.msra.mxu0 0.0
  %1903 = vmatprep.mubr.f32.mxu0 0.0
  %v1904 = vand.u32 %v297, 4294901760
  %1905 = vmatmul.mubr.f32.gmra.mrb[0].mxu0 %v1904
  %v1906 = vpop.f32.mrb[0].mxu0
  %v1907 = vadd.f32 %v1650, %v1906
  %v1908 = vpop.f32.mrb[0].mxu0
  %v1909 = vadd.f32 %v1652, %v1908
  %1910 = vmatprep.mubr.f32.mxu0 0.0
  %v1911 = vand.u32 %v300, 4294901760
  %1912 = vmatmul.mubr.f32.gmra.mrb[0].mxu0 %v1911
  %v1913 = vpop.f32.mrb[0].mxu0
  %v1914 = vadd.f32 %v1661, %v1913
  %v1915 = vpop.f32.mrb[0].mxu0
  %v1916 = vadd.f32 %v1663, %v1915
  %1917 = vmatprep.mubr.f32.mxu0 0.0
  %v1918 = vand.u32 %v303, 4294901760
  %1919 = vmatmul.mubr.f32.gmra.mrb[0].mxu0 %v1918
  %v1920 = vpop.f32.mrb[0].mxu0
  %v1921 = vadd.f32 %v1672, %v1920
  %v1922 = vpop.f32.mrb[0].mxu0
  %v1923 = vadd.f32 %v1674, %v1922
  %1924 = vmatprep.mubr.f32.mxu0 0.0
  %v1925 = vand.u32 %v306, 4294901760
  %1926 = vmatmul.mubr.f32.gmra.mrb[0].mxu0 %v1925
  %v1927 = vpop.f32.mrb[0].mxu0
  %v1928 = vadd.f32 %v1683, %v1927
  %v1929 = vpop.f32.mrb[0].mxu0
  %v1930 = vadd.f32 %v1685, %v1929
  %1931 = vmatprep.mubr.f32.mxu0 0.0
  %v1932 = vand.u32 %v309, 4294901760
  %1933 = vmatmul.mubr.f32.gmra.mrb[0].mxu0 %v1932
  %v1934 = vpop.f32.mrb[0].mxu0
  %v1935 = vadd.f32 %v1694, %v1934
  %v1936 = vpop.f32.mrb[0].mxu0
  %v1937 = vadd.f32 %v1696, %v1936
  %1938 = vmatprep.mubr.f32.mxu0 0.0
  %v1939 = vand.u32 %v312, 4294901760
  %1940 = vmatmul.mubr.f32.gmra.mrb[0].mxu0 %v1939
  %v1941 = vpop.f32.mrb[0].mxu0
  %v1942 = vadd.f32 %v1705, %v1941
  %v1943 = vpop.f32.mrb[0].mxu0
  %v1944 = vadd.f32 %v1707, %v1943
  %1945 = vmatprep.mubr.f32.mxu0 0.0
  %v1946 = vand.u32 %v315, 4294901760
  %1947 = vmatmul.mubr.f32.gmra.mrb[0].mxu0 %v1946
  %v1948 = vpop.f32.mrb[0].mxu0
  %v1949 = vadd.f32 %v1716, %v1948
  %v1950 = vpop.f32.mrb[0].mxu0
  %v1951 = vadd.f32 %v1718, %v1950
  %1952 = vmatprep.mubr.f32.mxu0 0.0
  %v1953 = vand.u32 %v318, 4294901760
  %1954 = vmatmul.mubr.f32.gmra.mrb[0].mxu0 %v1953
  %v1955 = vpop.f32.mrb[0].mxu0
  %v1956 = vadd.f32 %v1727, %v1955
  %v1957 = vpop.f32.mrb[0].mxu0
  %v1958 = vadd.f32 %v1729, %v1957
  %1959 = vmatprep.mubr.f32.mxu0 0.0
  %v1960 = vand.u32 %v321, 4294901760
  %1961 = vmatmul.mubr.f32.gmra.mrb[0].mxu0 %v1960
  %v1962 = vpop.f32.mrb[0].mxu0
  %v1963 = vadd.f32 %v1738, %v1962
  %v1964 = vpop.f32.mrb[0].mxu0
  %v1965 = vadd.f32 %v1740, %v1964
  %1966 = vmatprep.mubr.f32.mxu0 0.0
  %v1967 = vand.u32 %v324, 4294901760
  %1968 = vmatmul.mubr.f32.gmra.mrb[0].mxu0 %v1967
  %v1969 = vpop.f32.mrb[0].mxu0
  %v1970 = vadd.f32 %v1749, %v1969
  %v1971 = vpop.f32.mrb[0].mxu0
  %v1972 = vadd.f32 %v1751, %v1971
  %1973 = vmatprep.mubr.f32.mxu0 0.0
  %v1974 = vand.u32 %v327, 4294901760
  %1975 = vmatmul.mubr.f32.gmra.mrb[0].mxu0 %v1974
  %v1976 = vpop.f32.mrb[0].mxu0
  %v1977 = vadd.f32 %v1760, %v1976
  %v1978 = vpop.f32.mrb[0].mxu0
  %v1979 = vadd.f32 %v1762, %v1978
  %1980 = vmatprep.mubr.f32.mxu0 0.0
  %v1981 = vand.u32 %v330, 4294901760
  %1982 = vmatmul.mubr.f32.gmra.mrb[0].mxu0 %v1981
  %v1983 = vpop.f32.mrb[0].mxu0
  %v1984 = vadd.f32 %v1771, %v1983
  %v1985 = vpop.f32.mrb[0].mxu0
  %v1986 = vadd.f32 %v1773, %v1985
  %1987 = vmatprep.mubr.f32.mxu0 0.0
  %v1988 = vand.u32 %v333, 4294901760
  %1989 = vmatmul.mubr.f32.gmra.mrb[0].mxu0 %v1988
  %v1990 = vpop.f32.mrb[0].mxu0
  %v1991 = vadd.f32 %v1782, %v1990
  %v1992 = vpop.f32.mrb[0].mxu0
  %v1993 = vadd.f32 %v1784, %v1992
  %1994 = vmatprep.mubr.f32.mxu0 0.0
  %v1995 = vand.u32 %v336, 4294901760
  %1996 = vmatmul.mubr.f32.gmra.mrb[0].mxu0 %v1995
  %v1997 = vpop.f32.mrb[0].mxu0
  %v1998 = vadd.f32 %v1793, %v1997
  %v1999 = vpop.f32.mrb[0].mxu0
  %v2000 = vadd.f32 %v1795, %v1999
  %2001 = vmatprep.mubr.f32.mxu0 0.0
  %v2002 = vand.u32 %v339, 4294901760
  %2003 = vmatmul.mubr.f32.gmra.mrb[0].mxu0 %v2002
  %v2004 = vpop.f32.mrb[0].mxu0
  %v2005 = vadd.f32 %v1804, %v2004
  %v2006 = vpop.f32.mrb[0].mxu0
  %v2007 = vadd.f32 %v1806, %v2006
  %2008 = vmatprep.mubr.f32.mxu0 0.0
  %v2009 = vand.u32 %v342, 4294901760
  %2010 = vmatmul.mubr.f32.gmra.mrb[0].mxu0 %v2009
  %v2011 = vpop.f32.mrb[0].mxu0
  %v2012 = vadd.f32 %v1815, %v2011
  %v2013 = vpop.f32.mrb[0].mxu0
  %v2014 = vadd.f32 %v1817, %v2013
  %2015 = vdwg.mxu0
  %v2016 = vand.u32 %v1571, 4294901760
  %v2017 = vsub.f32 %v1571, %v2016
  %2018 = vmatprep.subr.mxu0 %v2017
  %v2019 = vand.u32 %v1570, 4294901760
  %v2020 = vsub.f32 %v1570, %v2019
  %2021 = vmatpush1.msra.mxu0 %v2020
  %v2022 = vand.u32 %v1573, 4294901760
  %v2023 = vsub.f32 %v1573, %v2022
  %2024 = vmatprep.subr.mxu0 %v2023
  %v2025 = vand.u32 %v1572, 4294901760
  %v2026 = vsub.f32 %v1572, %v2025
  %2027 = vmatpush1.msra.mxu0 %v2026
  %2028 = vmatprep.subr.mxu0 0.0
  %2029 = vmatpush1.msra.mxu0 0.0
  %2030 = vmatprep.subr.mxu0 0.0
  %2031 = vmatpush1.msra.mxu0 0.0
  %2032 = vmatprep.subr.mxu0 0.0
  %2033 = vmatpush1.msra.mxu0 0.0
  %2034 = vmatprep.subr.mxu0 0.0
  %2035 = vmatpush1.msra.mxu0 0.0
  %2036 = vmatprep.subr.mxu0 0.0
  %2037 = vmatpush1.msra.mxu0 0.0
  %2038 = vmatprep.subr.mxu0 0.0
  %2039 = vmatpush1.msra.mxu0 0.0
  %2040 = vmatprep.subr.mxu0 0.0
  %2041 = vmatpush1.msra.mxu0 0.0
  %2042 = vmatprep.subr.mxu0 0.0
  %2043 = vmatpush1.msra.mxu0 0.0
  %2044 = vmatprep.subr.mxu0 0.0
  %2045 = vmatpush1.msra.mxu0 0.0
  %2046 = vmatprep.subr.mxu0 0.0
  %2047 = vmatpush1.msra.mxu0 0.0
  %2048 = vmatprep.subr.mxu0 0.0
  %2049 = vmatpush1.msra.mxu0 0.0
  %2050 = vmatprep.subr.mxu0 0.0
  %2051 = vmatpush1.msra.mxu0 0.0
  %2052 = vmatprep.subr.mxu0 0.0
  %2053 = vmatpush1.msra.mxu0 0.0
  %2054 = vmatprep.subr.mxu0 0.0
  %2055 = vmatpush1.msra.mxu0 0.0
  %2056 = vmatprep.subr.mxu0 0.0
  %2057 = vmatpush1.msra.mxu0 0.0
  %2058 = vmatprep.subr.mxu0 0.0
  %2059 = vmatpush1.msra.mxu0 0.0
  %2060 = vmatprep.subr.mxu0 0.0
  %2061 = vmatpush1.msra.mxu0 0.0
  %2062 = vmatprep.subr.mxu0 0.0
  %2063 = vmatpush1.msra.mxu0 0.0
  %2064 = vmatprep.subr.mxu0 0.0
  %2065 = vmatpush1.msra.mxu0 0.0
  %2066 = vmatprep.subr.mxu0 0.0
  %2067 = vmatpush1.msra.mxu0 0.0
  %2068 = vmatprep.subr.mxu0 0.0
  %2069 = vmatpush1.msra.mxu0 0.0
  %2070 = vmatprep.subr.mxu0 0.0
  %2071 = vmatpush1.msra.mxu0 0.0
  %2072 = vmatprep.subr.mxu0 0.0
  %2073 = vmatpush1.msra.mxu0 0.0
  %2074 = vmatprep.subr.mxu0 0.0
  %2075 = vmatpush1.msra.mxu0 0.0
  %2076 = vmatprep.subr.mxu0 0.0
  %2077 = vmatpush1.msra.mxu0 0.0
  %2078 = vmatprep.subr.mxu0 0.0
  %2079 = vmatpush1.msra.mxu0 0.0
  %2080 = vmatprep.subr.mxu0 0.0
  %2081 = vmatpush1.msra.mxu0 0.0
  %2082 = vmatprep.subr.mxu0 0.0
  %2083 = vmatpush1.msra.mxu0 0.0
  %2084 = vmatprep.subr.mxu0 0.0
  %2085 = vmatpush1.msra.mxu0 0.0
  %2086 = vmatprep.subr.mxu0 0.0
  %2087 = vmatpush1.msra.mxu0 0.0
  %2088 = vmatprep.mubr.f32.mxu0 0.0
  %v2089 = vand.u32 %v297, 4294901760
  %v2090 = vsub.f32 %v297, %v2089
  %2091 = vmatmul.mubr.f32.gmra.mrb[0].mxu0 %v2090
  %v2092 = vpop.f32.mrb[0].mxu0
  %v2093 = vadd.f32 %v1907, %v2092
  %v2094 = vpop.f32.mrb[0].mxu0
  %v2095 = vadd.f32 %v1909, %v2094
  %2096 = vmatprep.mubr.f32.mxu0 0.0
  %v2097 = vand.u32 %v300, 4294901760
  %v2098 = vsub.f32 %v300, %v2097
  %2099 = vmatmul.mubr.f32.gmra.mrb[0].mxu0 %v2098
  %v2100 = vpop.f32.mrb[0].mxu0
  %v2101 = vadd.f32 %v1914, %v2100
  %v2102 = vpop.f32.mrb[0].mxu0
  %v2103 = vadd.f32 %v1916, %v2102
  %2104 = vmatprep.mubr.f32.mxu0 0.0
  %v2105 = vand.u32 %v303, 4294901760
  %v2106 = vsub.f32 %v303, %v2105
  %2107 = vmatmul.mubr.f32.gmra.mrb[0].mxu0 %v2106
  %v2108 = vpop.f32.mrb[0].mxu0
  %v2109 = vadd.f32 %v1921, %v2108
  %v2110 = vpop.f32.mrb[0].mxu0
  %v2111 = vadd.f32 %v1923, %v2110
  %2112 = vmatprep.mubr.f32.mxu0 0.0
  %v2113 = vand.u32 %v306, 4294901760
  %v2114 = vsub.f32 %v306, %v2113
  %2115 = vmatmul.mubr.f32.gmra.mrb[0].mxu0 %v2114
  %v2116 = vpop.f32.mrb[0].mxu0
  %v2117 = vadd.f32 %v1928, %v2116
  %v2118 = vpop.f32.mrb[0].mxu0
  %v2119 = vadd.f32 %v1930, %v2118
  %2120 = vmatprep.mubr.f32.mxu0 0.0
  %v2121 = vand.u32 %v309, 4294901760
  %v2122 = vsub.f32 %v309, %v2121
  %2123 = vmatmul.mubr.f32.gmra.mrb[0].mxu0 %v2122
  %v2124 = vpop.f32.mrb[0].mxu0
  %v2125 = vadd.f32 %v1935, %v2124
  %v2126 = vpop.f32.mrb[0].mxu0
  %v2127 = vadd.f32 %v1937, %v2126
  %2128 = vmatprep.mubr.f32.mxu0 0.0
  %v2129 = vand.u32 %v312, 4294901760
  %v2130 = vsub.f32 %v312, %v2129
  %2131 = vmatmul.mubr.f32.gmra.mrb[0].mxu0 %v2130
  %v2132 = vpop.f32.mrb[0].mxu0
  %v2133 = vadd.f32 %v1942, %v2132
  %v2134 = vpop.f32.mrb[0].mxu0
  %v2135 = vadd.f32 %v1944, %v2134
  %2136 = vmatprep.mubr.f32.mxu0 0.0
  %v2137 = vand.u32 %v315, 4294901760
  %v2138 = vsub.f32 %v315, %v2137
  %2139 = vmatmul.mubr.f32.gmra.mrb[0].mxu0 %v2138
  %v2140 = vpop.f32.mrb[0].mxu0
  %v2141 = vadd.f32 %v1949, %v2140
  %v2142 = vpop.f32.mrb[0].mxu0
  %v2143 = vadd.f32 %v1951, %v2142
  %2144 = vmatprep.mubr.f32.mxu0 0.0
  %v2145 = vand.u32 %v318, 4294901760
  %v2146 = vsub.f32 %v318, %v2145
  %2147 = vmatmul.mubr.f32.gmra.mrb[0].mxu0 %v2146
  %v2148 = vpop.f32.mrb[0].mxu0
  %v2149 = vadd.f32 %v1956, %v2148
  %v2150 = vpop.f32.mrb[0].mxu0
  %v2151 = vadd.f32 %v1958, %v2150
  %2152 = vmatprep.mubr.f32.mxu0 0.0
  %v2153 = vand.u32 %v321, 4294901760
  %v2154 = vsub.f32 %v321, %v2153
  %2155 = vmatmul.mubr.f32.gmra.mrb[0].mxu0 %v2154
  %v2156 = vpop.f32.mrb[0].mxu0
  %v2157 = vadd.f32 %v1963, %v2156
  %v2158 = vpop.f32.mrb[0].mxu0
  %v2159 = vadd.f32 %v1965, %v2158
  %2160 = vmatprep.mubr.f32.mxu0 0.0
  %v2161 = vand.u32 %v324, 4294901760
  %v2162 = vsub.f32 %v324, %v2161
  %2163 = vmatmul.mubr.f32.gmra.mrb[0].mxu0 %v2162
  %v2164 = vpop.f32.mrb[0].mxu0
  %v2165 = vadd.f32 %v1970, %v2164
  %v2166 = vpop.f32.mrb[0].mxu0
  %v2167 = vadd.f32 %v1972, %v2166
  %2168 = vmatprep.mubr.f32.mxu0 0.0
  %v2169 = vand.u32 %v327, 4294901760
  %v2170 = vsub.f32 %v327, %v2169
  %2171 = vmatmul.mubr.f32.gmra.mrb[0].mxu0 %v2170
  %v2172 = vpop.f32.mrb[0].mxu0
  %v2173 = vadd.f32 %v1977, %v2172
  %v2174 = vpop.f32.mrb[0].mxu0
  %v2175 = vadd.f32 %v1979, %v2174
  %2176 = vmatprep.mubr.f32.mxu0 0.0
  %v2177 = vand.u32 %v330, 4294901760
  %v2178 = vsub.f32 %v330, %v2177
  %2179 = vmatmul.mubr.f32.gmra.mrb[0].mxu0 %v2178
  %v2180 = vpop.f32.mrb[0].mxu0
  %v2181 = vadd.f32 %v1984, %v2180
  %v2182 = vpop.f32.mrb[0].mxu0
  %v2183 = vadd.f32 %v1986, %v2182
  %2184 = vmatprep.mubr.f32.mxu0 0.0
  %v2185 = vand.u32 %v333, 4294901760
  %v2186 = vsub.f32 %v333, %v2185
  %2187 = vmatmul.mubr.f32.gmra.mrb[0].mxu0 %v2186
  %v2188 = vpop.f32.mrb[0].mxu0
  %v2189 = vadd.f32 %v1991, %v2188
  %v2190 = vpop.f32.mrb[0].mxu0
  %v2191 = vadd.f32 %v1993, %v2190
  %2192 = vmatprep.mubr.f32.mxu0 0.0
  %v2193 = vand.u32 %v336, 4294901760
  %v2194 = vsub.f32 %v336, %v2193
  %2195 = vmatmul.mubr.f32.gmra.mrb[0].mxu0 %v2194
  %v2196 = vpop.f32.mrb[0].mxu0
  %v2197 = vadd.f32 %v1998, %v2196
  %v2198 = vpop.f32.mrb[0].mxu0
  %v2199 = vadd.f32 %v2000, %v2198
  %2200 = vmatprep.mubr.f32.mxu0 0.0
  %v2201 = vand.u32 %v339, 4294901760
  %v2202 = vsub.f32 %v339, %v2201
  %2203 = vmatmul.mubr.f32.gmra.mrb[0].mxu0 %v2202
  %v2204 = vpop.f32.mrb[0].mxu0
  %v2205 = vadd.f32 %v2005, %v2204
  %v2206 = vpop.f32.mrb[0].mxu0
  %v2207 = vadd.f32 %v2007, %v2206
  %2208 = vmatprep.mubr.f32.mxu0 0.0
  %v2209 = vand.u32 %v342, 4294901760
  %v2210 = vsub.f32 %v342, %v2209
  %2211 = vmatmul.mubr.f32.gmra.mrb[0].mxu0 %v2210
  %v2212 = vpop.f32.mrb[0].mxu0
  %v2213 = vadd.f32 %v2012, %v2212
  %v2214 = vpop.f32.mrb[0].mxu0
  %v2215 = vadd.f32 %v2014, %v2214
  %2216 = vdwg.mxu0
  %v2217 = vand.u32 %v1571, 4294901760
  %2218 = vmatprep.subr.mxu0 %v2217
  %v2219 = vand.u32 %v1570, 4294901760
  %2220 = vmatpush1.msra.mxu0 %v2219
  %v2221 = vand.u32 %v1573, 4294901760
  %2222 = vmatprep.subr.mxu0 %v2221
  %v2223 = vand.u32 %v1572, 4294901760
  %2224 = vmatpush1.msra.mxu0 %v2223
  %2225 = vmatprep.subr.mxu0 0.0
  %2226 = vmatpush1.msra.mxu0 0.0
  %2227 = vmatprep.subr.mxu0 0.0
  %2228 = vmatpush1.msra.mxu0 0.0
  %2229 = vmatprep.subr.mxu0 0.0
  %2230 = vmatpush1.msra.mxu0 0.0
  %2231 = vmatprep.subr.mxu0 0.0
  %2232 = vmatpush1.msra.mxu0 0.0
  %2233 = vmatprep.subr.mxu0 0.0
  %2234 = vmatpush1.msra.mxu0 0.0
  %2235 = vmatprep.subr.mxu0 0.0
  %2236 = vmatpush1.msra.mxu0 0.0
  %2237 = vmatprep.subr.mxu0 0.0
  %2238 = vmatpush1.msra.mxu0 0.0
  %2239 = vmatprep.subr.mxu0 0.0
  %2240 = vmatpush1.msra.mxu0 0.0
  %2241 = vmatprep.subr.mxu0 0.0
  %2242 = vmatpush1.msra.mxu0 0.0
  %2243 = vmatprep.subr.mxu0 0.0
  %2244 = vmatpush1.msra.mxu0 0.0
  %2245 = vmatprep.subr.mxu0 0.0
  %2246 = vmatpush1.msra.mxu0 0.0
  %2247 = vmatprep.subr.mxu0 0.0
  %2248 = vmatpush1.msra.mxu0 0.0
  %2249 = vmatprep.subr.mxu0 0.0
  %2250 = vmatpush1.msra.mxu0 0.0
  %2251 = vmatprep.subr.mxu0 0.0
  %2252 = vmatpush1.msra.mxu0 0.0
  %2253 = vmatprep.subr.mxu0 0.0
  %2254 = vmatpush1.msra.mxu0 0.0
  %2255 = vmatprep.subr.mxu0 0.0
  %2256 = vmatpush1.msra.mxu0 0.0
  %2257 = vmatprep.subr.mxu0 0.0
  %2258 = vmatpush1.msra.mxu0 0.0
  %2259 = vmatprep.subr.mxu0 0.0
  %2260 = vmatpush1.msra.mxu0 0.0
  %2261 = vmatprep.subr.mxu0 0.0
  %2262 = vmatpush1.msra.mxu0 0.0
  %2263 = vmatprep.subr.mxu0 0.0
  %2264 = vmatpush1.msra.mxu0 0.0
  %2265 = vmatprep.subr.mxu0 0.0
  %2266 = vmatpush1.msra.mxu0 0.0
  %2267 = vmatprep.subr.mxu0 0.0
  %2268 = vmatpush1.msra.mxu0 0.0
  %2269 = vmatprep.subr.mxu0 0.0
  %2270 = vmatpush1.msra.mxu0 0.0
  %2271 = vmatprep.subr.mxu0 0.0
  %2272 = vmatpush1.msra.mxu0 0.0
  %2273 = vmatprep.subr.mxu0 0.0
  %2274 = vmatpush1.msra.mxu0 0.0
  %2275 = vmatprep.subr.mxu0 0.0
  %2276 = vmatpush1.msra.mxu0 0.0
  %2277 = vmatprep.subr.mxu0 0.0
  %2278 = vmatpush1.msra.mxu0 0.0
  %2279 = vmatprep.subr.mxu0 0.0
  %2280 = vmatpush1.msra.mxu0 0.0
  %2281 = vmatprep.subr.mxu0 0.0
  %2282 = vmatpush1.msra.mxu0 0.0
  %2283 = vmatprep.subr.mxu0 0.0
  %2284 = vmatpush1.msra.mxu0 0.0
  %2285 = vmatprep.mubr.f32.mxu0 0.0
  %v2286 = vand.u32 %v297, 4294901760
  %v2287 = vsub.f32 %v297, %v2286
  %v2288 = vand.u32 %v2287, 4294901760
  %2289 = vmatmul.mubr.f32.gmra.mrb[0].mxu0 %v2288
  %v2290 = vpop.f32.mrb[0].mxu0
  %v2291 = vadd.f32 %v2093, %v2290
  %v2292 = vpop.f32.mrb[0].mxu0
  %v2293 = vadd.f32 %v2095, %v2292
  %2294 = vmatprep.mubr.f32.mxu0 0.0
  %v2295 = vand.u32 %v300, 4294901760
  %v2296 = vsub.f32 %v300, %v2295
  %v2297 = vand.u32 %v2296, 4294901760
  %2298 = vmatmul.mubr.f32.gmra.mrb[0].mxu0 %v2297
  %v2299 = vpop.f32.mrb[0].mxu0
  %v2300 = vadd.f32 %v2101, %v2299
  %v2301 = vpop.f32.mrb[0].mxu0
  %v2302 = vadd.f32 %v2103, %v2301
  %2303 = vmatprep.mubr.f32.mxu0 0.0
  %v2304 = vand.u32 %v303, 4294901760
  %v2305 = vsub.f32 %v303, %v2304
  %v2306 = vand.u32 %v2305, 4294901760
  %2307 = vmatmul.mubr.f32.gmra.mrb[0].mxu0 %v2306
  %v2308 = vpop.f32.mrb[0].mxu0
  %v2309 = vadd.f32 %v2109, %v2308
  %v2310 = vpop.f32.mrb[0].mxu0
  %v2311 = vadd.f32 %v2111, %v2310
  %2312 = vmatprep.mubr.f32.mxu0 0.0
  %v2313 = vand.u32 %v306, 4294901760
  %v2314 = vsub.f32 %v306, %v2313
  %v2315 = vand.u32 %v2314, 4294901760
  %2316 = vmatmul.mubr.f32.gmra.mrb[0].mxu0 %v2315
  %v2317 = vpop.f32.mrb[0].mxu0
  %v2318 = vadd.f32 %v2117, %v2317
  %v2319 = vpop.f32.mrb[0].mxu0
  %v2320 = vadd.f32 %v2119, %v2319
  %2321 = vmatprep.mubr.f32.mxu0 0.0
  %v2322 = vand.u32 %v309, 4294901760
  %v2323 = vsub.f32 %v309, %v2322
  %v2324 = vand.u32 %v2323, 4294901760
  %2325 = vmatmul.mubr.f32.gmra.mrb[0].mxu0 %v2324
  %v2326 = vpop.f32.mrb[0].mxu0
  %v2327 = vadd.f32 %v2125, %v2326
  %v2328 = vpop.f32.mrb[0].mxu0
  %v2329 = vadd.f32 %v2127, %v2328
  %2330 = vmatprep.mubr.f32.mxu0 0.0
  %v2331 = vand.u32 %v312, 4294901760
  %v2332 = vsub.f32 %v312, %v2331
  %v2333 = vand.u32 %v2332, 4294901760
  %2334 = vmatmul.mubr.f32.gmra.mrb[0].mxu0 %v2333
  %v2335 = vpop.f32.mrb[0].mxu0
  %v2336 = vadd.f32 %v2133, %v2335
  %v2337 = vpop.f32.mrb[0].mxu0
  %v2338 = vadd.f32 %v2135, %v2337
  %2339 = vmatprep.mubr.f32.mxu0 0.0
  %v2340 = vand.u32 %v315, 4294901760
  %v2341 = vsub.f32 %v315, %v2340
  %v2342 = vand.u32 %v2341, 4294901760
  %2343 = vmatmul.mubr.f32.gmra.mrb[0].mxu0 %v2342
  %v2344 = vpop.f32.mrb[0].mxu0
  %v2345 = vadd.f32 %v2141, %v2344
  %v2346 = vpop.f32.mrb[0].mxu0
  %v2347 = vadd.f32 %v2143, %v2346
  %2348 = vmatprep.mubr.f32.mxu0 0.0
  %v2349 = vand.u32 %v318, 4294901760
  %v2350 = vsub.f32 %v318, %v2349
  %v2351 = vand.u32 %v2350, 4294901760
  %2352 = vmatmul.mubr.f32.gmra.mrb[0].mxu0 %v2351
  %v2353 = vpop.f32.mrb[0].mxu0
  %v2354 = vadd.f32 %v2149, %v2353
  %v2355 = vpop.f32.mrb[0].mxu0
  %v2356 = vadd.f32 %v2151, %v2355
  %2357 = vmatprep.mubr.f32.mxu0 0.0
  %v2358 = vand.u32 %v321, 4294901760
  %v2359 = vsub.f32 %v321, %v2358
  %v2360 = vand.u32 %v2359, 4294901760
  %2361 = vmatmul.mubr.f32.gmra.mrb[0].mxu0 %v2360
  %v2362 = vpop.f32.mrb[0].mxu0
  %v2363 = vadd.f32 %v2157, %v2362
  %v2364 = vpop.f32.mrb[0].mxu0
  %v2365 = vadd.f32 %v2159, %v2364
  %2366 = vmatprep.mubr.f32.mxu0 0.0
  %v2367 = vand.u32 %v324, 4294901760
  %v2368 = vsub.f32 %v324, %v2367
  %v2369 = vand.u32 %v2368, 4294901760
  %2370 = vmatmul.mubr.f32.gmra.mrb[0].mxu0 %v2369
  %v2371 = vpop.f32.mrb[0].mxu0
  %v2372 = vadd.f32 %v2165, %v2371
  %v2373 = vpop.f32.mrb[0].mxu0
  %v2374 = vadd.f32 %v2167, %v2373
  %2375 = vmatprep.mubr.f32.mxu0 0.0
  %v2376 = vand.u32 %v327, 4294901760
  %v2377 = vsub.f32 %v327, %v2376
  %v2378 = vand.u32 %v2377, 4294901760
  %2379 = vmatmul.mubr.f32.gmra.mrb[0].mxu0 %v2378
  %v2380 = vpop.f32.mrb[0].mxu0
  %v2381 = vadd.f32 %v2173, %v2380
  %v2382 = vpop.f32.mrb[0].mxu0
  %v2383 = vadd.f32 %v2175, %v2382
  %2384 = vmatprep.mubr.f32.mxu0 0.0
  %v2385 = vand.u32 %v330, 4294901760
  %v2386 = vsub.f32 %v330, %v2385
  %v2387 = vand.u32 %v2386, 4294901760
  %2388 = vmatmul.mubr.f32.gmra.mrb[0].mxu0 %v2387
  %v2389 = vpop.f32.mrb[0].mxu0
  %v2390 = vadd.f32 %v2181, %v2389
  %v2391 = vpop.f32.mrb[0].mxu0
  %v2392 = vadd.f32 %v2183, %v2391
  %2393 = vmatprep.mubr.f32.mxu0 0.0
  %v2394 = vand.u32 %v333, 4294901760
  %v2395 = vsub.f32 %v333, %v2394
  %v2396 = vand.u32 %v2395, 4294901760
  %2397 = vmatmul.mubr.f32.gmra.mrb[0].mxu0 %v2396
  %v2398 = vpop.f32.mrb[0].mxu0
  %v2399 = vadd.f32 %v2189, %v2398
  %v2400 = vpop.f32.mrb[0].mxu0
  %v2401 = vadd.f32 %v2191, %v2400
  %2402 = vmatprep.mubr.f32.mxu0 0.0
  %v2403 = vand.u32 %v336, 4294901760
  %v2404 = vsub.f32 %v336, %v2403
  %v2405 = vand.u32 %v2404, 4294901760
  %2406 = vmatmul.mubr.f32.gmra.mrb[0].mxu0 %v2405
  %v2407 = vpop.f32.mrb[0].mxu0
  %v2408 = vadd.f32 %v2197, %v2407
  %v2409 = vpop.f32.mrb[0].mxu0
  %v2410 = vadd.f32 %v2199, %v2409
  %2411 = vmatprep.mubr.f32.mxu0 0.0
  %v2412 = vand.u32 %v339, 4294901760
  %v2413 = vsub.f32 %v339, %v2412
  %v2414 = vand.u32 %v2413, 4294901760
  %2415 = vmatmul.mubr.f32.gmra.mrb[0].mxu0 %v2414
  %v2416 = vpop.f32.mrb[0].mxu0
  %v2417 = vadd.f32 %v2205, %v2416
  %v2418 = vpop.f32.mrb[0].mxu0
  %v2419 = vadd.f32 %v2207, %v2418
  %2420 = vmatprep.mubr.f32.mxu0 0.0
  %v2421 = vand.u32 %v342, 4294901760
  %v2422 = vsub.f32 %v342, %v2421
  %v2423 = vand.u32 %v2422, 4294901760
  %2424 = vmatmul.mubr.f32.gmra.mrb[0].mxu0 %v2423
  %v2425 = vpop.f32.mrb[0].mxu0
  %v2426 = vadd.f32 %v2213, %v2425
  %v2427 = vpop.f32.mrb[0].mxu0
  %v2428 = vadd.f32 %v2215, %v2427
  %2429 = vdwg.mxu0
  %v2430 = vand.u32 %v1571, 4294901760
  %v2431 = vsub.f32 %v1571, %v2430
  %v2432 = vand.u32 %v2431, 4294901760
  %2433 = vmatprep.subr.mxu0 %v2432
  %v2434 = vand.u32 %v1570, 4294901760
  %v2435 = vsub.f32 %v1570, %v2434
  %v2436 = vand.u32 %v2435, 4294901760
  %2437 = vmatpush1.msra.mxu0 %v2436
  %v2438 = vand.u32 %v1573, 4294901760
  %v2439 = vsub.f32 %v1573, %v2438
  %v2440 = vand.u32 %v2439, 4294901760
  %2441 = vmatprep.subr.mxu0 %v2440
  %v2442 = vand.u32 %v1572, 4294901760
  %v2443 = vsub.f32 %v1572, %v2442
  %v2444 = vand.u32 %v2443, 4294901760
  %2445 = vmatpush1.msra.mxu0 %v2444
  %2446 = vmatprep.subr.mxu0 0.0
  %2447 = vmatpush1.msra.mxu0 0.0
  %2448 = vmatprep.subr.mxu0 0.0
  %2449 = vmatpush1.msra.mxu0 0.0
  %2450 = vmatprep.subr.mxu0 0.0
  %2451 = vmatpush1.msra.mxu0 0.0
  %2452 = vmatprep.subr.mxu0 0.0
  %2453 = vmatpush1.msra.mxu0 0.0
  %2454 = vmatprep.subr.mxu0 0.0
  %2455 = vmatpush1.msra.mxu0 0.0
  %2456 = vmatprep.subr.mxu0 0.0
  %2457 = vmatpush1.msra.mxu0 0.0
  %2458 = vmatprep.subr.mxu0 0.0
  %2459 = vmatpush1.msra.mxu0 0.0
  %2460 = vmatprep.subr.mxu0 0.0
  %2461 = vmatpush1.msra.mxu0 0.0
  %2462 = vmatprep.subr.mxu0 0.0
  %2463 = vmatpush1.msra.mxu0 0.0
  %2464 = vmatprep.subr.mxu0 0.0
  %2465 = vmatpush1.msra.mxu0 0.0
  %2466 = vmatprep.subr.mxu0 0.0
  %2467 = vmatpush1.msra.mxu0 0.0
  %2468 = vmatprep.subr.mxu0 0.0
  %2469 = vmatpush1.msra.mxu0 0.0
  %2470 = vmatprep.subr.mxu0 0.0
  %2471 = vmatpush1.msra.mxu0 0.0
  %2472 = vmatprep.subr.mxu0 0.0
  %2473 = vmatpush1.msra.mxu0 0.0
  %2474 = vmatprep.subr.mxu0 0.0
  %2475 = vmatpush1.msra.mxu0 0.0
  %2476 = vmatprep.subr.mxu0 0.0
  %2477 = vmatpush1.msra.mxu0 0.0
  %2478 = vmatprep.subr.mxu0 0.0
  %2479 = vmatpush1.msra.mxu0 0.0
  %2480 = vmatprep.subr.mxu0 0.0
  %2481 = vmatpush1.msra.mxu0 0.0
  %2482 = vmatprep.subr.mxu0 0.0
  %2483 = vmatpush1.msra.mxu0 0.0
  %2484 = vmatprep.subr.mxu0 0.0
  %2485 = vmatpush1.msra.mxu0 0.0
  %2486 = vmatprep.subr.mxu0 0.0
  %2487 = vmatpush1.msra.mxu0 0.0
  %2488 = vmatprep.subr.mxu0 0.0
  %2489 = vmatpush1.msra.mxu0 0.0
  %2490 = vmatprep.subr.mxu0 0.0
  %2491 = vmatpush1.msra.mxu0 0.0
  %2492 = vmatprep.subr.mxu0 0.0
  %2493 = vmatpush1.msra.mxu0 0.0
  %2494 = vmatprep.subr.mxu0 0.0
  %2495 = vmatpush1.msra.mxu0 0.0
  %2496 = vmatprep.subr.mxu0 0.0
  %2497 = vmatpush1.msra.mxu0 0.0
  %2498 = vmatprep.subr.mxu0 0.0
  %2499 = vmatpush1.msra.mxu0 0.0
  %2500 = vmatprep.subr.mxu0 0.0
  %2501 = vmatpush1.msra.mxu0 0.0
  %2502 = vmatprep.subr.mxu0 0.0
  %2503 = vmatpush1.msra.mxu0 0.0
  %2504 = vmatprep.subr.mxu0 0.0
  %2505 = vmatpush1.msra.mxu0 0.0
  %2506 = vmatprep.mubr.f32.mxu0 0.0
  %v2507 = vand.u32 %v297, 4294901760
  %2508 = vmatmul.mubr.f32.gmra.mrb[0].mxu0 %v2507
  %v2509 = vpop.f32.mrb[0].mxu0
  %v2510 = vadd.f32 %v2291, %v2509
  %v2511 = vpop.f32.mrb[0].mxu0
  %v2512 = vadd.f32 %v2293, %v2511
  %2513 = vmatprep.mubr.f32.mxu0 0.0
  %v2514 = vand.u32 %v300, 4294901760
  %2515 = vmatmul.mubr.f32.gmra.mrb[0].mxu0 %v2514
  %v2516 = vpop.f32.mrb[0].mxu0
  %v2517 = vadd.f32 %v2300, %v2516
  %v2518 = vpop.f32.mrb[0].mxu0
  %v2519 = vadd.f32 %v2302, %v2518
  %2520 = vmatprep.mubr.f32.mxu0 0.0
  %v2521 = vand.u32 %v303, 4294901760
  %2522 = vmatmul.mubr.f32.gmra.mrb[0].mxu0 %v2521
  %v2523 = vpop.f32.mrb[0].mxu0
  %v2524 = vadd.f32 %v2309, %v2523
  %v2525 = vpop.f32.mrb[0].mxu0
  %v2526 = vadd.f32 %v2311, %v2525
  %2527 = vmatprep.mubr.f32.mxu0 0.0
  %v2528 = vand.u32 %v306, 4294901760
  %2529 = vmatmul.mubr.f32.gmra.mrb[0].mxu0 %v2528
  %v2530 = vpop.f32.mrb[0].mxu0
  %v2531 = vadd.f32 %v2318, %v2530
  %v2532 = vpop.f32.mrb[0].mxu0
  %v2533 = vadd.f32 %v2320, %v2532
  %2534 = vmatprep.mubr.f32.mxu0 0.0
  %v2535 = vand.u32 %v309, 4294901760
  %2536 = vmatmul.mubr.f32.gmra.mrb[0].mxu0 %v2535
  %v2537 = vpop.f32.mrb[0].mxu0
  %v2538 = vadd.f32 %v2327, %v2537
  %v2539 = vpop.f32.mrb[0].mxu0
  %v2540 = vadd.f32 %v2329, %v2539
  %2541 = vmatprep.mubr.f32.mxu0 0.0
  %v2542 = vand.u32 %v312, 4294901760
  %2543 = vmatmul.mubr.f32.gmra.mrb[0].mxu0 %v2542
  %v2544 = vpop.f32.mrb[0].mxu0
  %v2545 = vadd.f32 %v2336, %v2544
  %v2546 = vpop.f32.mrb[0].mxu0
  %v2547 = vadd.f32 %v2338, %v2546
  %2548 = vmatprep.mubr.f32.mxu0 0.0
  %v2549 = vand.u32 %v315, 4294901760
  %2550 = vmatmul.mubr.f32.gmra.mrb[0].mxu0 %v2549
  %v2551 = vpop.f32.mrb[0].mxu0
  %v2552 = vadd.f32 %v2345, %v2551
  %v2553 = vpop.f32.mrb[0].mxu0
  %v2554 = vadd.f32 %v2347, %v2553
  %2555 = vmatprep.mubr.f32.mxu0 0.0
  %v2556 = vand.u32 %v318, 4294901760
  %2557 = vmatmul.mubr.f32.gmra.mrb[0].mxu0 %v2556
  %v2558 = vpop.f32.mrb[0].mxu0
  %v2559 = vadd.f32 %v2354, %v2558
  %v2560 = vpop.f32.mrb[0].mxu0
  %v2561 = vadd.f32 %v2356, %v2560
  %2562 = vmatprep.mubr.f32.mxu0 0.0
  %v2563 = vand.u32 %v321, 4294901760
  %2564 = vmatmul.mubr.f32.gmra.mrb[0].mxu0 %v2563
  %v2565 = vpop.f32.mrb[0].mxu0
  %v2566 = vadd.f32 %v2363, %v2565
  %v2567 = vpop.f32.mrb[0].mxu0
  %v2568 = vadd.f32 %v2365, %v2567
  %2569 = vmatprep.mubr.f32.mxu0 0.0
  %v2570 = vand.u32 %v324, 4294901760
  %2571 = vmatmul.mubr.f32.gmra.mrb[0].mxu0 %v2570
  %v2572 = vpop.f32.mrb[0].mxu0
  %v2573 = vadd.f32 %v2372, %v2572
  %v2574 = vpop.f32.mrb[0].mxu0
  %v2575 = vadd.f32 %v2374, %v2574
  %2576 = vmatprep.mubr.f32.mxu0 0.0
  %v2577 = vand.u32 %v327, 4294901760
  %2578 = vmatmul.mubr.f32.gmra.mrb[0].mxu0 %v2577
  %v2579 = vpop.f32.mrb[0].mxu0
  %v2580 = vadd.f32 %v2381, %v2579
  %v2581 = vpop.f32.mrb[0].mxu0
  %v2582 = vadd.f32 %v2383, %v2581
  %2583 = vmatprep.mubr.f32.mxu0 0.0
  %v2584 = vand.u32 %v330, 4294901760
  %2585 = vmatmul.mubr.f32.gmra.mrb[0].mxu0 %v2584
  %v2586 = vpop.f32.mrb[0].mxu0
  %v2587 = vadd.f32 %v2390, %v2586
  %v2588 = vpop.f32.mrb[0].mxu0
  %v2589 = vadd.f32 %v2392, %v2588
  %2590 = vmatprep.mubr.f32.mxu0 0.0
  %v2591 = vand.u32 %v333, 4294901760
  %2592 = vmatmul.mubr.f32.gmra.mrb[0].mxu0 %v2591
  %v2593 = vpop.f32.mrb[0].mxu0
  %v2594 = vadd.f32 %v2399, %v2593
  %v2595 = vpop.f32.mrb[0].mxu0
  %v2596 = vadd.f32 %v2401, %v2595
  %2597 = vmatprep.mubr.f32.mxu0 0.0
  %v2598 = vand.u32 %v336, 4294901760
  %2599 = vmatmul.mubr.f32.gmra.mrb[0].mxu0 %v2598
  %v2600 = vpop.f32.mrb[0].mxu0
  %v2601 = vadd.f32 %v2408, %v2600
  %v2602 = vpop.f32.mrb[0].mxu0
  %v2603 = vadd.f32 %v2410, %v2602
  %2604 = vmatprep.mubr.f32.mxu0 0.0
  %v2605 = vand.u32 %v339, 4294901760
  %2606 = vmatmul.mubr.f32.gmra.mrb[0].mxu0 %v2605
  %v2607 = vpop.f32.mrb[0].mxu0
  %v2608 = vadd.f32 %v2417, %v2607
  %v2609 = vpop.f32.mrb[0].mxu0
  %v2610 = vadd.f32 %v2419, %v2609
  %2611 = vmatprep.mubr.f32.mxu0 0.0
  %v2612 = vand.u32 %v342, 4294901760
  %2613 = vmatmul.mubr.f32.gmra.mrb[0].mxu0 %v2612
  %v2614 = vpop.f32.mrb[0].mxu0
  %v2615 = vadd.f32 %v2426, %v2614
  %v2616 = vpop.f32.mrb[0].mxu0
  %v2617 = vadd.f32 %v2428, %v2616
  %2618 = vdwg.mxu0
  %v2619 = vand.u32 %v1571, 4294901760
  %2620 = vmatprep.subr.mxu0 %v2619
  %v2621 = vand.u32 %v1570, 4294901760
  %2622 = vmatpush1.msra.mxu0 %v2621
  %v2623 = vand.u32 %v1573, 4294901760
  %2624 = vmatprep.subr.mxu0 %v2623
  %v2625 = vand.u32 %v1572, 4294901760
  %2626 = vmatpush1.msra.mxu0 %v2625
  %2627 = vmatprep.subr.mxu0 0.0
  %2628 = vmatpush1.msra.mxu0 0.0
  %2629 = vmatprep.subr.mxu0 0.0
  %2630 = vmatpush1.msra.mxu0 0.0
  %2631 = vmatprep.subr.mxu0 0.0
  %2632 = vmatpush1.msra.mxu0 0.0
  %2633 = vmatprep.subr.mxu0 0.0
  %2634 = vmatpush1.msra.mxu0 0.0
  %2635 = vmatprep.subr.mxu0 0.0
  %2636 = vmatpush1.msra.mxu0 0.0
  %2637 = vmatprep.subr.mxu0 0.0
  %2638 = vmatpush1.msra.mxu0 0.0
  %2639 = vmatprep.subr.mxu0 0.0
  %2640 = vmatpush1.msra.mxu0 0.0
  %2641 = vmatprep.subr.mxu0 0.0
  %2642 = vmatpush1.msra.mxu0 0.0
  %2643 = vmatprep.subr.mxu0 0.0
  %2644 = vmatpush1.msra.mxu0 0.0
  %2645 = vmatprep.subr.mxu0 0.0
  %2646 = vmatpush1.msra.mxu0 0.0
  %2647 = vmatprep.subr.mxu0 0.0
  %2648 = vmatpush1.msra.mxu0 0.0
  %2649 = vmatprep.subr.mxu0 0.0
  %2650 = vmatpush1.msra.mxu0 0.0
  %2651 = vmatprep.subr.mxu0 0.0
  %2652 = vmatpush1.msra.mxu0 0.0
  %2653 = vmatprep.subr.mxu0 0.0
  %2654 = vmatpush1.msra.mxu0 0.0
  %2655 = vmatprep.subr.mxu0 0.0
  %2656 = vmatpush1.msra.mxu0 0.0
  %2657 = vmatprep.subr.mxu0 0.0
  %2658 = vmatpush1.msra.mxu0 0.0
  %2659 = vmatprep.subr.mxu0 0.0
  %2660 = vmatpush1.msra.mxu0 0.0
  %2661 = vmatprep.subr.mxu0 0.0
  %2662 = vmatpush1.msra.mxu0 0.0
  %2663 = vmatprep.subr.mxu0 0.0
  %2664 = vmatpush1.msra.mxu0 0.0
  %2665 = vmatprep.subr.mxu0 0.0
  %2666 = vmatpush1.msra.mxu0 0.0
  %2667 = vmatprep.subr.mxu0 0.0
  %2668 = vmatpush1.msra.mxu0 0.0
  %2669 = vmatprep.subr.mxu0 0.0
  %2670 = vmatpush1.msra.mxu0 0.0
  %2671 = vmatprep.subr.mxu0 0.0
  %2672 = vmatpush1.msra.mxu0 0.0
  %2673 = vmatprep.subr.mxu0 0.0
  %2674 = vmatpush1.msra.mxu0 0.0
  %2675 = vmatprep.subr.mxu0 0.0
  %2676 = vmatpush1.msra.mxu0 0.0
  %2677 = vmatprep.subr.mxu0 0.0
  %2678 = vmatpush1.msra.mxu0 0.0
  %2679 = vmatprep.subr.mxu0 0.0
  %2680 = vmatpush1.msra.mxu0 0.0
  %2681 = vmatprep.subr.mxu0 0.0
  %2682 = vmatpush1.msra.mxu0 0.0
  %2683 = vmatprep.subr.mxu0 0.0
  %2684 = vmatpush1.msra.mxu0 0.0
  %2685 = vmatprep.subr.mxu0 0.0
  %2686 = vmatpush1.msra.mxu0 0.0
  %2687 = vmatprep.mubr.f32.mxu0 0.0
  %v2688 = vand.u32 %v297, 4294901760
  %2689 = vmatmul.mubr.f32.gmra.mrb[0].mxu0 %v2688
  %v2690 = vpop.f32.mrb[0].mxu0
  %v2691 = vadd.f32 %v2510, %v2690
  %v2692 = vpop.f32.mrb[0].mxu0
  %v2693 = vadd.f32 %v2512, %v2692
  %2694 = vmatprep.mubr.f32.mxu0 0.0
  %v2695 = vand.u32 %v300, 4294901760
  %2696 = vmatmul.mubr.f32.gmra.mrb[0].mxu0 %v2695
  %v2697 = vpop.f32.mrb[0].mxu0
  %v2698 = vadd.f32 %v2517, %v2697
  %v2699 = vpop.f32.mrb[0].mxu0
  %v2700 = vadd.f32 %v2519, %v2699
  %2701 = vmatprep.mubr.f32.mxu0 0.0
  %v2702 = vand.u32 %v303, 4294901760
  %2703 = vmatmul.mubr.f32.gmra.mrb[0].mxu0 %v2702
  %v2704 = vpop.f32.mrb[0].mxu0
  %v2705 = vadd.f32 %v2524, %v2704
  %v2706 = vpop.f32.mrb[0].mxu0
  %v2707 = vadd.f32 %v2526, %v2706
  %2708 = vmatprep.mubr.f32.mxu0 0.0
  %v2709 = vand.u32 %v306, 4294901760
  %2710 = vmatmul.mubr.f32.gmra.mrb[0].mxu0 %v2709
  %v2711 = vpop.f32.mrb[0].mxu0
  %v2712 = vadd.f32 %v2531, %v2711
  %v2713 = vpop.f32.mrb[0].mxu0
  %v2714 = vadd.f32 %v2533, %v2713
  %2715 = vmatprep.mubr.f32.mxu0 0.0
  %v2716 = vand.u32 %v309, 4294901760
  %2717 = vmatmul.mubr.f32.gmra.mrb[0].mxu0 %v2716
  %v2718 = vpop.f32.mrb[0].mxu0
  %v2719 = vadd.f32 %v2538, %v2718
  %v2720 = vpop.f32.mrb[0].mxu0
  %v2721 = vadd.f32 %v2540, %v2720
  %2722 = vmatprep.mubr.f32.mxu0 0.0
  %v2723 = vand.u32 %v312, 4294901760
  %2724 = vmatmul.mubr.f32.gmra.mrb[0].mxu0 %v2723
  %v2725 = vpop.f32.mrb[0].mxu0
  %v2726 = vadd.f32 %v2545, %v2725
  %v2727 = vpop.f32.mrb[0].mxu0
  %v2728 = vadd.f32 %v2547, %v2727
  %2729 = vmatprep.mubr.f32.mxu0 0.0
  %v2730 = vand.u32 %v315, 4294901760
  %2731 = vmatmul.mubr.f32.gmra.mrb[0].mxu0 %v2730
  %v2732 = vpop.f32.mrb[0].mxu0
  %v2733 = vadd.f32 %v2552, %v2732
  %v2734 = vpop.f32.mrb[0].mxu0
  %v2735 = vadd.f32 %v2554, %v2734
  %2736 = vmatprep.mubr.f32.mxu0 0.0
  %v2737 = vand.u32 %v318, 4294901760
  %2738 = vmatmul.mubr.f32.gmra.mrb[0].mxu0 %v2737
  %v2739 = vpop.f32.mrb[0].mxu0
  %v2740 = vadd.f32 %v2559, %v2739
  %v2741 = vpop.f32.mrb[0].mxu0
  %v2742 = vadd.f32 %v2561, %v2741
  %2743 = vmatprep.mubr.f32.mxu0 0.0
  %v2744 = vand.u32 %v321, 4294901760
  %2745 = vmatmul.mubr.f32.gmra.mrb[0].mxu0 %v2744
  %v2746 = vpop.f32.mrb[0].mxu0
  %v2747 = vadd.f32 %v2566, %v2746
  %v2748 = vpop.f32.mrb[0].mxu0
  %v2749 = vadd.f32 %v2568, %v2748
  %2750 = vmatprep.mubr.f32.mxu0 0.0
  %v2751 = vand.u32 %v324, 4294901760
  %2752 = vmatmul.mubr.f32.gmra.mrb[0].mxu0 %v2751
  %v2753 = vpop.f32.mrb[0].mxu0
  %v2754 = vadd.f32 %v2573, %v2753
  %v2755 = vpop.f32.mrb[0].mxu0
  %v2756 = vadd.f32 %v2575, %v2755
  %2757 = vmatprep.mubr.f32.mxu0 0.0
  %v2758 = vand.u32 %v327, 4294901760
  %2759 = vmatmul.mubr.f32.gmra.mrb[0].mxu0 %v2758
  %v2760 = vpop.f32.mrb[0].mxu0
  %v2761 = vadd.f32 %v2580, %v2760
  %v2762 = vpop.f32.mrb[0].mxu0
  %v2763 = vadd.f32 %v2582, %v2762
  %2764 = vmatprep.mubr.f32.mxu0 0.0
  %v2765 = vand.u32 %v330, 4294901760
  %2766 = vmatmul.mubr.f32.gmra.mrb[0].mxu0 %v2765
  %v2767 = vpop.f32.mrb[0].mxu0
  %v2768 = vadd.f32 %v2587, %v2767
  %v2769 = vpop.f32.mrb[0].mxu0
  %v2770 = vadd.f32 %v2589, %v2769
  %2771 = vmatprep.mubr.f32.mxu0 0.0
  %v2772 = vand.u32 %v333, 4294901760
  %2773 = vmatmul.mubr.f32.gmra.mrb[0].mxu0 %v2772
  %v2774 = vpop.f32.mrb[0].mxu0
  %v2775 = vadd.f32 %v2594, %v2774
  %v2776 = vpop.f32.mrb[0].mxu0
  %v2777 = vadd.f32 %v2596, %v2776
  %2778 = vmatprep.mubr.f32.mxu0 0.0
  %v2779 = vand.u32 %v336, 4294901760
  %2780 = vmatmul.mubr.f32.gmra.mrb[0].mxu0 %v2779
  %v2781 = vpop.f32.mrb[0].mxu0
  %v2782 = vadd.f32 %v2601, %v2781
  %v2783 = vpop.f32.mrb[0].mxu0
  %v2784 = vadd.f32 %v2603, %v2783
  %2785 = vmatprep.mubr.f32.mxu0 0.0
  %v2786 = vand.u32 %v339, 4294901760
  %2787 = vmatmul.mubr.f32.gmra.mrb[0].mxu0 %v2786
  %v2788 = vpop.f32.mrb[0].mxu0
  %v2789 = vadd.f32 %v2608, %v2788
  %v2790 = vpop.f32.mrb[0].mxu0
  %v2791 = vadd.f32 %v2610, %v2790
  %2792 = vmatprep.mubr.f32.mxu0 0.0
  %v2793 = vand.u32 %v342, 4294901760
  %2794 = vmatmul.mubr.f32.gmra.mrb[0].mxu0 %v2793
  %v2795 = vpop.f32.mrb[0].mxu0
  %v2796 = vadd.f32 %v2615, %v2795
  %v2797 = vpop.f32.mrb[0].mxu0
  %v2798 = vadd.f32 %v2617, %v2797
  %2799 = vdwg.mxu0
  %v2800 = vmul.f32 %v1461, %v2691
  %v2801 = vmul.f32 %v1463, %v2693
  %v2802 = vmul.f32 %v1468, %v2698
  %v2803 = vmul.f32 %v1470, %v2700
  %v2804 = vmul.f32 %v1475, %v2705
  %v2805 = vmul.f32 %v1477, %v2707
  %v2806 = vmul.f32 %v1482, %v2712
  %v2807 = vmul.f32 %v1484, %v2714
  %v2808 = vmul.f32 %v1489, %v2719
  %v2809 = vmul.f32 %v1491, %v2721
  %v2810 = vmul.f32 %v1496, %v2726
  %v2811 = vmul.f32 %v1498, %v2728
  %v2812 = vmul.f32 %v1503, %v2733
  %v2813 = vmul.f32 %v1505, %v2735
  %v2814 = vmul.f32 %v1510, %v2740
  %v2815 = vmul.f32 %v1512, %v2742
  %v2816 = vmul.f32 %v1517, %v2747
  %v2817 = vmul.f32 %v1519, %v2749
  %v2818 = vmul.f32 %v1524, %v2754
  %v2819 = vmul.f32 %v1526, %v2756
  %v2820 = vmul.f32 %v1531, %v2761
  %v2821 = vmul.f32 %v1533, %v2763
  %v2822 = vmul.f32 %v1538, %v2768
  %v2823 = vmul.f32 %v1540, %v2770
  %v2824 = vmul.f32 %v1545, %v2775
  %v2825 = vmul.f32 %v1547, %v2777
  %v2826 = vmul.f32 %v1552, %v2782
  %v2827 = vmul.f32 %v1554, %v2784
  %v2828 = vmul.f32 %v1559, %v2789
  %v2829 = vmul.f32 %v1561, %v2791
  %v2830 = vmul.f32 %v1566, %v2796
  %v2831 = vmul.f32 %v1568, %v2798
  %2832 = vst [vmem:[%s5] sm:$0xff] %v2800
  %vm2833 = vcmask 64512
  %2834 = vst.msk [vmem:[%s5 + $0x8] sm:$0xff] %vm2833, %v2801
  %2835 = vst [vmem:[%s5 + $0x10] sm:$0xff] %v2802
  %2836 = vst.msk [vmem:[%s5 + $0x18] sm:$0xff] %vm2833, %v2803
  %2837 = vst [vmem:[%s5 + $0x20] sm:$0xff] %v2804
  %2838 = vst.msk [vmem:[%s5 + $0x28] sm:$0xff] %vm2833, %v2805
  %2839 = vst [vmem:[%s5 + $0x30] sm:$0xff] %v2806
  %2840 = vst.msk [vmem:[%s5 + $0x38] sm:$0xff] %vm2833, %v2807
  %2841 = vst [vmem:[%s5 + $0x40] sm:$0xff] %v2808
  %2842 = vst.msk [vmem:[%s5 + $0x48] sm:$0xff] %vm2833, %v2809
  %2843 = vst [vmem:[%s5 + $0x50] sm:$0xff] %v2810
  %2844 = vst.msk [vmem:[%s5 + $0x58] sm:$0xff] %vm2833, %v2811
  %2845 = vst [vmem:[%s5 + $0x60] sm:$0xff] %v2812
  %2846 = vst.msk [vmem:[%s5 + $0x68] sm:$0xff] %vm2833, %v2813
  %2847 = vst [vmem:[%s5 + $0x70] sm:$0xff] %v2814
  %2848 = vst.msk [vmem:[%s5 + $0x78] sm:$0xff] %vm2833, %v2815
  %2849 = vst [vmem:[%s5 + $0x80] sm:$0xff] %v2816
  %2850 = vst.msk [vmem:[%s5 + $0x88] sm:$0xff] %vm2833, %v2817
  %2851 = vst [vmem:[%s5 + $0x90] sm:$0xff] %v2818
  %2852 = vst.msk [vmem:[%s5 + $0x98] sm:$0xff] %vm2833, %v2819
  %2853 = vst [vmem:[%s5 + $0xa0] sm:$0xff] %v2820
  %2854 = vst.msk [vmem:[%s5 + $0xa8] sm:$0xff] %vm2833, %v2821
  %2855 = vst [vmem:[%s5 + $0xb0] sm:$0xff] %v2822
  %2856 = vst.msk [vmem:[%s5 + $0xb8] sm:$0xff] %vm2833, %v2823
  %2857 = vst [vmem:[%s5 + $0xc0] sm:$0xff] %v2824
  %2858 = vst.msk [vmem:[%s5 + $0xc8] sm:$0xff] %vm2833, %v2825
  %2859 = vst [vmem:[%s5 + $0xd0] sm:$0xff] %v2826
  %2860 = vst.msk [vmem:[%s5 + $0xd8] sm:$0xff] %vm2833, %v2827
  %2861 = vst [vmem:[%s5 + $0xe0] sm:$0xff] %v2828
  %2862 = vst.msk [vmem:[%s5 + $0xe8] sm:$0xff] %vm2833, %v2829
  %2863 = vst [vmem:[%s5 + $0xf0] sm:$0xff] %v2830
  %2864 = vst.msk [vmem:[%s5 + $0xf8] sm:$0xff] %vm2833, %v2831
  // Predicated region
  $region22: #{tpu_custom_call.1} parent=0 // pred_check
    _
  $region23: #{tpu_custom_call.1} parent=0 // pred_check_branch
    %2866 = sbr.rel (0) target = $region25
  $region24: #{tpu_custom_call.1} parent=0 // pred_region
    _
  $region25: #{tpu_custom_call.1} parent=0 // pred_fallthru
    _
  // Predicated region
  $region26: #{tpu_custom_call.1} parent=0 // pred_check
    _
  $region27: #{tpu_custom_call.1} parent=0 // pred_check_branch
    %2868 = sbr.rel (0) target = $region29
  $region28: #{tpu_custom_call.1} parent=0 // pred_region
    _
  $region29: #{tpu_custom_call.1} parent=0 // pred_fallthru
    _

</llo_original>
